<compile_context>
chip_gen: v5e
topology: v5e:2x2
jax: 0.10.0
libtpu: 0.0.40
codegen_flags: <defaults>
</compile_context>

<pallas_src>
import functools
import math

import jax
import jax.numpy as jnp
from jax.experimental import pallas as pl
from jax.experimental.pallas import tpu as pltpu


# ----------------------------------------------------------------------------
# Kernel helpers
# ----------------------------------------------------------------------------
def _layer_norm(x, gamma, beta, eps=1e-5):
    mu = jnp.mean(x, axis=-1, keepdims=True)
    var = jnp.mean((x - mu) ** 2, axis=-1, keepdims=True)
    return (x - mu) * jax.lax.rsqrt(var + eps) * gamma + beta


# ----------------------------------------------------------------------------
# Pallas kernel: full EpochTransformer forward (all layers, whole batch).
# ----------------------------------------------------------------------------
def transformer_kernel(
    src_ref, pe_ref,
    wqkv_ref, bqkv_ref, wo_ref, bo_ref,
    w1_ref, b1_ref, w2_ref, b2_ref,
    g1_ref, be1_ref, g2_ref, be2_ref,
    o_ref,
    *, num_layers, num_heads,
):
    B, S, D = src_ref.shape
    BS = B * S
    H = num_heads
    dk = D // H

    # positional encoding + (identity) dropout, flattened to a (B*S, D) slab
    x = (src_ref[...] + pe_ref[...]).reshape(BS, D)

    for l in range(num_layers):                         # static unroll (L small)
        # ---- fused QKV projection (1/sqrt(dk) already folded into Wq/bq) ----
        qkv = jnp.dot(x, wqkv_ref[l],
                      preferred_element_type=jnp.float32) + bqkv_ref[l]

        def split_heads(t):
            # lane band t of qkv -> (B*H, S, dk) with batch index n = b*H + h.
            # Uses only proven-cheap ops: lane slice, major-dim stack, major
            # reshape (no tiled-dim transposes).
            per_head = [
                qkv[:, t * D + h * dk: t * D + (h + 1) * dk].reshape(B, S, dk)
                for h in range(H)
            ]
            return jnp.stack(per_head, axis=1).reshape(B * H, S, dk)

        qh = split_heads(0)            # already scaled by 1/sqrt(dk)
        kh = split_heads(1)
        vh = split_heads(2)

        # ---- ONE batched attention over all (b, h) pairs ---------------------
        s = jnp.einsum('nqd,nkd->nqk', qh, kh,
                       preferred_element_type=jnp.float32)
        s = s - jnp.max(s, axis=-1, keepdims=True)
        p = jnp.exp(s)
        p = p * pl.reciprocal(jnp.sum(p, axis=-1, keepdims=True), approx=True)
        ctx = jnp.einsum('nqk,nkd->nqd', p, vh,
                         preferred_element_type=jnp.float32)   # (B*H, S, dk)

        # ---- head merge fused into the output projection ---------------------
        # concat(ctx_heads) @ Wo  ==  sum_h ctx_h @ Wo[h*dk:(h+1)*dk, :]
        wo_heads = wo_ref[l]                                   # (H, dk, D)
        wo_n = jnp.concatenate([wo_heads] * B, axis=0)         # (B*H, dk, D)
        tmp = jnp.einsum('nsd,ndf->nsf', ctx, wo_n,
                         preferred_element_type=jnp.float32)   # (B*H, S, D)
        tmp = tmp.reshape(B, H, S, D)
        attn = tmp[:, 0]
        for h in range(1, H):                                  # major-dim adds
            attn = attn + tmp[:, h]
        attn_out = attn.reshape(BS, D) + bo_ref[l]

        # residual + LayerNorm 1 (dropout == identity in eval mode)
        x = _layer_norm(x + attn_out, g1_ref[l], be1_ref[l])

        # ---- position-wise feed-forward --------------------------------------
        h1 = jnp.dot(x, w1_ref[l], preferred_element_type=jnp.float32) + b1_ref[l]
        h1 = jnp.maximum(h1, 0.0)                              # ReLU
        ff = jnp.dot(h1, w2_ref[l], preferred_element_type=jnp.float32) + b2_ref[l]

        # residual + LayerNorm 2
        x = _layer_norm(x + ff, g2_ref[l], be2_ref[l])

    # TODO(synk): lane-dense (BS*D/128, 128) output slab once shapes grow; the
    # required (16,32)->(4,128) lane repack is not worth the relayout risk at a
    # 2 KB output.
    o_ref[...] = x.reshape(B, S, D)


# ----------------------------------------------------------------------------
# Wrapper: single pallas_call for the full forward pass.
# ----------------------------------------------------------------------------
def epoch_transformer_forward(src, pe, params, *, num_heads):
    B, S, D = src.shape
    L = params["wqkv"].shape[0]
    d_ff = params["w1"].shape[-1]

    order = ["wqkv", "bqkv", "wo", "bo", "w1", "b1", "w2", "b2",
             "g1", "be1", "g2", "be2"]
    vals = [params[name] for name in order]

    def full_spec(a):
        return pl.BlockSpec(a.shape, lambda i, nd=a.ndim: (0,) * nd)

    in_specs = [full_spec(src), full_spec(pe)] + [full_spec(v) for v in vals]

    # Advisory cost estimate so XLA can overlap this small kernel with
    # surrounding ops.
    tokens = B * S
    lin_flops = 2 * D * (3 * D) + 2 * D * D + 2 * D * d_ff + 2 * d_ff * D
    attn_flops = 4 * S * D                       # scores + context per token
    flops = L * tokens * (lin_flops + attn_flops)
    transcendentals = L * (B * num_heads * S * S + 2 * tokens + B * num_heads * S)
    bytes_accessed = sum(int(v.size) * v.dtype.itemsize for v in [src, pe] + vals)
    bytes_accessed += B * S * D * 4              # output writeback
    cost = pl.CostEstimate(flops=int(flops),
                           transcendentals=int(transcendentals),
                           bytes_accessed=int(bytes_accessed))

    kernel = functools.partial(transformer_kernel,
                               num_layers=L, num_heads=num_heads)

    return pl.pallas_call(
        kernel,
        out_shape=jax.ShapeDtypeStruct((B, S, D), jnp.float32),
        grid_spec=pltpu.PrefetchScalarGridSpec(
            num_scalar_prefetch=0,
            grid=(1,),
            in_specs=in_specs,
            out_specs=pl.BlockSpec((B, S, D), lambda i: (0, 0, 0)),
        ),
        compiler_params=pltpu.CompilerParams(
            dimension_semantics=("arbitrary",),
        ),
        cost_estimate=cost,
    )(src, pe, *vals)


# ----------------------------------------------------------------------------
# Parameter construction (deterministic, synthetic) + positional encoding.
# ----------------------------------------------------------------------------
def make_positional_encoding(max_seq_length, d_model):
    pos = jnp.arange(max_seq_length, dtype=jnp.float32)[:, None]
    div = jnp.exp(jnp.arange(0, d_model, 2, dtype=jnp.float32)
                  * (-math.log(10000.0) / d_model))
    pe = jnp.zeros((max_seq_length, d_model), dtype=jnp.float32)
    pe = pe.at[:, 0::2].set(jnp.sin(pos * div))
    pe = pe.at[:, 1::2].set(jnp.cos(pos * div))
    return pe


def init_stacked_params(key, num_layers, d_model, d_ff, num_heads):
    dk = d_model // num_heads
    q_scale = 1.0 / math.sqrt(dk)
    s = 0.02

    def lin(k, din, dout):
        return (jax.random.normal(k, (din, dout), jnp.float32) * s,
                jnp.zeros((1, dout), jnp.float32))

    per_layer = []
    for lk in jax.random.split(key, num_layers):
        ks = jax.random.split(lk, 6)
        wq, bq = lin(ks[0], d_model, d_model)
        wk, bk = lin(ks[1], d_model, d_model)
        wv, bv = lin(ks[2], d_model, d_model)
        wo, bo = lin(ks[3], d_model, d_model)
        w1, b1 = lin(ks[4], d_model, d_ff)
        w2, b2 = lin(ks[5], d_ff, d_model)
        # fold the 1/sqrt(d_k) attention scale into the Q projection
        wqkv = jnp.concatenate([wq * q_scale, wk, wv], axis=1)   # (D, 3D)
        bqkv = jnp.concatenate([bq * q_scale, bk, bv], axis=1)   # (1, 3D)
        # Wo stored per-head (H, dk, D) so the head merge fuses into the
        # batched output-projection einsum inside the kernel.
        wo_heads = wo.reshape(num_heads, dk, d_model)
        per_layer.append(dict(
            wqkv=wqkv, bqkv=bqkv, wo=wo_heads, bo=bo, w1=w1, b1=b1, w2=w2, b2=b2,
            g1=jnp.ones((1, d_model), jnp.float32),
            be1=jnp.zeros((1, d_model), jnp.float32),
            g2=jnp.ones((1, d_model), jnp.float32),
            be2=jnp.zeros((1, d_model), jnp.float32),
        ))
    return {name: jnp.stack([p[name] for p in per_layer], axis=0)
            for name in per_layer[0]}


# ----------------------------------------------------------------------------
# Main
# ----------------------------------------------------------------------------
if __name__ == "__main__":
    batch = 2
    seq = 8
    d_model = 32
    num_heads = 4
    num_layers = 2
    d_ff = 64
    max_seq_length = 16
    # dropout=0.1 -> identity at inference time

    key = jax.random.PRNGKey(0)
    k_src, k_params = jax.random.split(key)

    src = jax.random.normal(k_src, (batch, seq, d_model), jnp.float32)
    pe = make_positional_encoding(max_seq_length, d_model)[:seq]
    params = init_stacked_params(k_params, num_layers, d_model, d_ff, num_heads)

    out = epoch_transformer_forward(src, pe, params, num_heads=num_heads)
    out = jax.block_until_ready(out)

    assert out.shape == (batch, seq, d_model)
    assert bool(jnp.all(jnp.isfinite(out)))
    print("KERNEL_OK")
</pallas_src>

<mosaic_0001>
module attributes {stable_mosaic.version = 11 : i64} {
  func.func @transformer_kernel(%arg0: i32, %arg1: memref<2x8x32xf32, #tpu.memory_space<vmem>>, %arg2: memref<8x32xf32, #tpu.memory_space<vmem>>, %arg3: memref<2x32x96xf32, #tpu.memory_space<vmem>>, %arg4: memref<2x1x96xf32, #tpu.memory_space<vmem>>, %arg5: memref<2x4x8x32xf32, #tpu.memory_space<vmem>>, %arg6: memref<2x1x32xf32, #tpu.memory_space<vmem>>, %arg7: memref<2x32x64xf32, #tpu.memory_space<vmem>>, %arg8: memref<2x1x64xf32, #tpu.memory_space<vmem>>, %arg9: memref<2x64x32xf32, #tpu.memory_space<vmem>>, %arg10: memref<2x1x32xf32, #tpu.memory_space<vmem>>, %arg11: memref<2x1x32xf32, #tpu.memory_space<vmem>>, %arg12: memref<2x1x32xf32, #tpu.memory_space<vmem>>, %arg13: memref<2x1x32xf32, #tpu.memory_space<vmem>>, %arg14: memref<2x1x32xf32, #tpu.memory_space<vmem>>, %arg15: memref<2x8x32xf32, #tpu.memory_space<vmem>>) attributes {dimension_semantics = [#tpu.dimension_semantics<arbitrary>], iteration_bounds = array<i64: 1>, scalar_prefetch = 0 : i64, scratch_operands = 0 : i64, tpu.core_type = #tpu.core_type<tc>, window_params = [{pipeline_mode = #tpu.pipeline_mode<synchronous>, transform_indices = @transform_0, window_bounds = array<i64: 2, 8, 32>}, {pipeline_mode = #tpu.pipeline_mode<synchronous>, transform_indices = @transform_1, window_bounds = array<i64: 8, 32>}, {pipeline_mode = #tpu.pipeline_mode<synchronous>, transform_indices = @transform_2, window_bounds = array<i64: 2, 32, 96>}, {pipeline_mode = #tpu.pipeline_mode<synchronous>, transform_indices = @transform_3, window_bounds = array<i64: 2, 1, 96>}, {pipeline_mode = #tpu.pipeline_mode<synchronous>, transform_indices = @transform_4, window_bounds = array<i64: 2, 4, 8, 32>}, {pipeline_mode = #tpu.pipeline_mode<synchronous>, transform_indices = @transform_5, window_bounds = array<i64: 2, 1, 32>}, {pipeline_mode = #tpu.pipeline_mode<synchronous>, transform_indices = @transform_6, window_bounds = array<i64: 2, 32, 64>}, {pipeline_mode = #tpu.pipeline_mode<synchronous>, transform_indices = @transform_7, window_bounds = array<i64: 2, 1, 64>}, {pipeline_mode = #tpu.pipeline_mode<synchronous>, transform_indices = @transform_8, window_bounds = array<i64: 2, 64, 32>}, {pipeline_mode = #tpu.pipeline_mode<synchronous>, transform_indices = @transform_9, window_bounds = array<i64: 2, 1, 32>}, {pipeline_mode = #tpu.pipeline_mode<synchronous>, transform_indices = @transform_10, window_bounds = array<i64: 2, 1, 32>}, {pipeline_mode = #tpu.pipeline_mode<synchronous>, transform_indices = @transform_11, window_bounds = array<i64: 2, 1, 32>}, {pipeline_mode = #tpu.pipeline_mode<synchronous>, transform_indices = @transform_12, window_bounds = array<i64: 2, 1, 32>}, {pipeline_mode = #tpu.pipeline_mode<synchronous>, transform_indices = @transform_13, window_bounds = array<i64: 2, 1, 32>}, {pipeline_mode = #tpu.pipeline_mode<synchronous>, transform_indices = @transform_14, window_bounds = array<i64: 2, 8, 32>}]} {
    %c0 = arith.constant 0 : index
    %c0_0 = arith.constant 0 : index
    %c0_1 = arith.constant 0 : index
    %0 = vector.load %arg1[%c0, %c0_0, %c0_1] : memref<2x8x32xf32, #tpu.memory_space<vmem>>, vector<2x8x32xf32>
    %c0_2 = arith.constant 0 : index
    %c0_3 = arith.constant 0 : index
    %1 = vector.load %arg2[%c0_2, %c0_3] : memref<8x32xf32, #tpu.memory_space<vmem>>, vector<8x32xf32>
    %2 = vector.shape_cast %1 : vector<8x32xf32> to vector<1x8x32xf32>
    %3 = vector.broadcast %2 : vector<1x8x32xf32> to vector<2x8x32xf32>
    %4 = arith.addf %0, %3 : vector<2x8x32xf32>
    %5 = vector.shape_cast %4 : vector<2x8x32xf32> to vector<16x32xf32>
    %c0_4 = arith.constant 0 : index
    %c0_5 = arith.constant 0 : index
    %c0_6 = arith.constant 0 : index
    %6 = vector.load %arg3[%c0_4, %c0_5, %c0_6] : memref<2x32x96xf32, #tpu.memory_space<vmem>>, vector<1x32x96xf32>
    %7 = vector.shape_cast %6 : vector<1x32x96xf32> to vector<32x96xf32>
    %cst = arith.constant dense<0.000000e+00> : vector<16x96xf32>
    %8 = tpu.matmul %5, %7, %cst {dimension_numbers = #tpu.dot_dimension_numbers<[1], [0], [0], [1], [0, 0, 1, 1], [], []>} : vector<16x32xf32>, vector<32x96xf32>, vector<16x96xf32> -> vector<16x96xf32>
    %c0_7 = arith.constant 0 : index
    %c0_8 = arith.constant 0 : index
    %c0_9 = arith.constant 0 : index
    %9 = vector.load %arg4[%c0_7, %c0_8, %c0_9] : memref<2x1x96xf32, #tpu.memory_space<vmem>>, vector<1x1x96xf32>
    %10 = vector.shape_cast %9 : vector<1x1x96xf32> to vector<1x96xf32>
    %11 = vector.broadcast %10 : vector<1x96xf32> to vector<16x96xf32>
    %12 = arith.addf %8, %11 : vector<16x96xf32>
    %13 = vector.extract_strided_slice %12 {offsets = [0, 0], sizes = [16, 8], strides = [1, 1]} : vector<16x96xf32> to vector<16x8xf32>
    %14 = vector.shape_cast %13 : vector<16x8xf32> to vector<2x8x8xf32>
    %15 = vector.extract_strided_slice %12 {offsets = [0, 8], sizes = [16, 8], strides = [1, 1]} : vector<16x96xf32> to vector<16x8xf32>
    %16 = vector.shape_cast %15 : vector<16x8xf32> to vector<2x8x8xf32>
    %17 = vector.extract_strided_slice %12 {offsets = [0, 16], sizes = [16, 8], strides = [1, 1]} : vector<16x96xf32> to vector<16x8xf32>
    %18 = vector.shape_cast %17 : vector<16x8xf32> to vector<2x8x8xf32>
    %19 = vector.extract_strided_slice %12 {offsets = [0, 24], sizes = [16, 8], strides = [1, 1]} : vector<16x96xf32> to vector<16x8xf32>
    %20 = vector.shape_cast %19 : vector<16x8xf32> to vector<2x8x8xf32>
    %21 = vector.shape_cast %14 : vector<2x8x8xf32> to vector<2x1x8x8xf32>
    %22 = vector.shape_cast %16 : vector<2x8x8xf32> to vector<2x1x8x8xf32>
    %23 = vector.shape_cast %18 : vector<2x8x8xf32> to vector<2x1x8x8xf32>
    %24 = vector.shape_cast %20 : vector<2x8x8xf32> to vector<2x1x8x8xf32>
    %25 = tpu.concatenate %21, %22, %23, %24 in 1 : vector<2x1x8x8xf32>, vector<2x1x8x8xf32>, vector<2x1x8x8xf32>, vector<2x1x8x8xf32> -> vector<2x4x8x8xf32>
    %26 = vector.shape_cast %25 : vector<2x4x8x8xf32> to vector<8x8x8xf32>
    %27 = vector.extract_strided_slice %12 {offsets = [0, 32], sizes = [16, 8], strides = [1, 1]} : vector<16x96xf32> to vector<16x8xf32>
    %28 = vector.shape_cast %27 : vector<16x8xf32> to vector<2x8x8xf32>
    %29 = vector.extract_strided_slice %12 {offsets = [0, 40], sizes = [16, 8], strides = [1, 1]} : vector<16x96xf32> to vector<16x8xf32>
    %30 = vector.shape_cast %29 : vector<16x8xf32> to vector<2x8x8xf32>
    %31 = vector.extract_strided_slice %12 {offsets = [0, 48], sizes = [16, 8], strides = [1, 1]} : vector<16x96xf32> to vector<16x8xf32>
    %32 = vector.shape_cast %31 : vector<16x8xf32> to vector<2x8x8xf32>
    %33 = vector.extract_strided_slice %12 {offsets = [0, 56], sizes = [16, 8], strides = [1, 1]} : vector<16x96xf32> to vector<16x8xf32>
    %34 = vector.shape_cast %33 : vector<16x8xf32> to vector<2x8x8xf32>
    %35 = vector.shape_cast %28 : vector<2x8x8xf32> to vector<2x1x8x8xf32>
    %36 = vector.shape_cast %30 : vector<2x8x8xf32> to vector<2x1x8x8xf32>
    %37 = vector.shape_cast %32 : vector<2x8x8xf32> to vector<2x1x8x8xf32>
    %38 = vector.shape_cast %34 : vector<2x8x8xf32> to vector<2x1x8x8xf32>
    %39 = tpu.concatenate %35, %36, %37, %38 in 1 : vector<2x1x8x8xf32>, vector<2x1x8x8xf32>, vector<2x1x8x8xf32>, vector<2x1x8x8xf32> -> vector<2x4x8x8xf32>
    %40 = vector.shape_cast %39 : vector<2x4x8x8xf32> to vector<8x8x8xf32>
    %41 = vector.extract_strided_slice %12 {offsets = [0, 64], sizes = [16, 8], strides = [1, 1]} : vector<16x96xf32> to vector<16x8xf32>
    %42 = vector.shape_cast %41 : vector<16x8xf32> to vector<2x8x8xf32>
    %43 = vector.extract_strided_slice %12 {offsets = [0, 72], sizes = [16, 8], strides = [1, 1]} : vector<16x96xf32> to vector<16x8xf32>
    %44 = vector.shape_cast %43 : vector<16x8xf32> to vector<2x8x8xf32>
    %45 = vector.extract_strided_slice %12 {offsets = [0, 80], sizes = [16, 8], strides = [1, 1]} : vector<16x96xf32> to vector<16x8xf32>
    %46 = vector.shape_cast %45 : vector<16x8xf32> to vector<2x8x8xf32>
    %47 = vector.extract_strided_slice %12 {offsets = [0, 88], sizes = [16, 8], strides = [1, 1]} : vector<16x96xf32> to vector<16x8xf32>
    %48 = vector.shape_cast %47 : vector<16x8xf32> to vector<2x8x8xf32>
    %49 = vector.shape_cast %42 : vector<2x8x8xf32> to vector<2x1x8x8xf32>
    %50 = vector.shape_cast %44 : vector<2x8x8xf32> to vector<2x1x8x8xf32>
    %51 = vector.shape_cast %46 : vector<2x8x8xf32> to vector<2x1x8x8xf32>
    %52 = vector.shape_cast %48 : vector<2x8x8xf32> to vector<2x1x8x8xf32>
    %53 = tpu.concatenate %49, %50, %51, %52 in 1 : vector<2x1x8x8xf32>, vector<2x1x8x8xf32>, vector<2x1x8x8xf32>, vector<2x1x8x8xf32> -> vector<2x4x8x8xf32>
    %54 = vector.shape_cast %53 : vector<2x4x8x8xf32> to vector<8x8x8xf32>
    "tpu.trace_start"() <{level = 10 : i32, message = "nqd,nkd->nqk"}> : () -> ()
    %cst_10 = arith.constant dense<0.000000e+00> : vector<8x8x8xf32>
    %55 = tpu.matmul %26, %40, %cst_10 {dimension_numbers = #tpu.dot_dimension_numbers<[2], [2], [1], [1], [0, 0, 0, 1, 1, 1], [0], [0]>} : vector<8x8x8xf32>, vector<8x8x8xf32>, vector<8x8x8xf32> -> vector<8x8x8xf32>
    "tpu.trace_stop"() : () -> ()
    %cst_11 = arith.constant dense<0xFF800000> : vector<8x8xf32>
    %56 = vector.multi_reduction <maximumf>, %55, %cst_11 [2] : vector<8x8x8xf32> to vector<8x8xf32>
    %57 = vector.shape_cast %56 : vector<8x8xf32> to vector<8x8x1xf32>
    %58 = vector.broadcast %57 : vector<8x8x1xf32> to vector<8x8x8xf32>
    %59 = arith.subf %55, %58 : vector<8x8x8xf32>
    %60 = math.exp %59 : vector<8x8x8xf32>
    %cst_12 = arith.constant dense<0.000000e+00> : vector<8x8xf32>
    %61 = vector.multi_reduction <add>, %60, %cst_12 [2] : vector<8x8x8xf32> to vector<8x8xf32>
    %62 = vector.shape_cast %61 : vector<8x8xf32> to vector<8x8x1xf32>
    %63 = tpu.reciprocal %62 {approx = true} : vector<8x8x1xf32> -> vector<8x8x1xf32>
    %64 = vector.broadcast %63 : vector<8x8x1xf32> to vector<8x8x8xf32>
    %65 = arith.mulf %60, %64 : vector<8x8x8xf32>
    "tpu.trace_start"() <{level = 10 : i32, message = "nqk,nkd->nqd"}> : () -> ()
    %cst_13 = arith.constant dense<0.000000e+00> : vector<8x8x8xf32>
    %66 = tpu.matmul %65, %54, %cst_13 {dimension_numbers = #tpu.dot_dimension_numbers<[2], [1], [1], [2], [0, 0, 0, 1, 1, 2], [0], [0]>} : vector<8x8x8xf32>, vector<8x8x8xf32>, vector<8x8x8xf32> -> vector<8x8x8xf32>
    "tpu.trace_stop"() : () -> ()
    %c0_14 = arith.constant 0 : index
    %c0_15 = arith.constant 0 : index
    %c0_16 = arith.constant 0 : index
    %c0_17 = arith.constant 0 : index
    %67 = vector.load %arg5[%c0_14, %c0_15, %c0_16, %c0_17] : memref<2x4x8x32xf32, #tpu.memory_space<vmem>>, vector<1x4x8x32xf32>
    %68 = vector.shape_cast %67 : vector<1x4x8x32xf32> to vector<4x8x32xf32>
    %69 = tpu.concatenate %68, %68 in 0 : vector<4x8x32xf32>, vector<4x8x32xf32> -> vector<8x8x32xf32>
    "tpu.trace_start"() <{level = 10 : i32, message = "nsd,ndf->nsf"}> : () -> ()
    %cst_18 = arith.constant dense<0.000000e+00> : vector<8x8x32xf32>
    %70 = tpu.matmul %66, %69, %cst_18 {dimension_numbers = #tpu.dot_dimension_numbers<[2], [1], [1], [2], [0, 0, 0, 1, 1, 2], [0], [0]>} : vector<8x8x8xf32>, vector<8x8x32xf32>, vector<8x8x32xf32> -> vector<8x8x32xf32>
    "tpu.trace_stop"() : () -> ()
    %71 = vector.shape_cast %70 : vector<8x8x32xf32> to vector<2x4x8x32xf32>
    %72 = vector.extract_strided_slice %71 {offsets = [0, 0, 0, 0], sizes = [2, 1, 8, 32], strides = [1, 1, 1, 1]} : vector<2x4x8x32xf32> to vector<2x1x8x32xf32>
    %73 = vector.shape_cast %72 : vector<2x1x8x32xf32> to vector<2x8x32xf32>
    %74 = vector.extract_strided_slice %71 {offsets = [0, 1, 0, 0], sizes = [2, 1, 8, 32], strides = [1, 1, 1, 1]} : vector<2x4x8x32xf32> to vector<2x1x8x32xf32>
    %75 = vector.shape_cast %74 : vector<2x1x8x32xf32> to vector<2x8x32xf32>
    %76 = arith.addf %73, %75 : vector<2x8x32xf32>
    %77 = vector.extract_strided_slice %71 {offsets = [0, 2, 0, 0], sizes = [2, 1, 8, 32], strides = [1, 1, 1, 1]} : vector<2x4x8x32xf32> to vector<2x1x8x32xf32>
    %78 = vector.shape_cast %77 : vector<2x1x8x32xf32> to vector<2x8x32xf32>
    %79 = arith.addf %76, %78 : vector<2x8x32xf32>
    %80 = vector.extract_strided_slice %71 {offsets = [0, 3, 0, 0], sizes = [2, 1, 8, 32], strides = [1, 1, 1, 1]} : vector<2x4x8x32xf32> to vector<2x1x8x32xf32>
    %81 = vector.shape_cast %80 : vector<2x1x8x32xf32> to vector<2x8x32xf32>
    %82 = arith.addf %79, %81 : vector<2x8x32xf32>
    %83 = vector.shape_cast %82 : vector<2x8x32xf32> to vector<16x32xf32>
    %c0_19 = arith.constant 0 : index
    %c0_20 = arith.constant 0 : index
    %c0_21 = arith.constant 0 : index
    %84 = vector.load %arg6[%c0_19, %c0_20, %c0_21] : memref<2x1x32xf32, #tpu.memory_space<vmem>>, vector<1x1x32xf32>
    %85 = vector.shape_cast %84 : vector<1x1x32xf32> to vector<1x32xf32>
    %86 = vector.broadcast %85 : vector<1x32xf32> to vector<16x32xf32>
    %87 = arith.addf %83, %86 : vector<16x32xf32>
    %88 = arith.addf %5, %87 : vector<16x32xf32>
    %c0_22 = arith.constant 0 : index
    %c0_23 = arith.constant 0 : index
    %c0_24 = arith.constant 0 : index
    %89 = vector.load %arg11[%c0_22, %c0_23, %c0_24] : memref<2x1x32xf32, #tpu.memory_space<vmem>>, vector<1x1x32xf32>
    %90 = vector.shape_cast %89 : vector<1x1x32xf32> to vector<1x32xf32>
    %c0_25 = arith.constant 0 : index
    %c0_26 = arith.constant 0 : index
    %c0_27 = arith.constant 0 : index
    %91 = vector.load %arg12[%c0_25, %c0_26, %c0_27] : memref<2x1x32xf32, #tpu.memory_space<vmem>>, vector<1x1x32xf32>
    %92 = vector.shape_cast %91 : vector<1x1x32xf32> to vector<1x32xf32>
    %cst_28 = arith.constant dense<0.000000e+00> : vector<16xf32>
    %93 = vector.multi_reduction <add>, %88, %cst_28 [1] : vector<16x32xf32> to vector<16xf32>
    %94 = vector.shape_cast %93 : vector<16xf32> to vector<16x1xf32>
    %cst_29 = arith.constant 3.200000e+01 : f32
    %95 = vector.broadcast %cst_29 : f32 to vector<16x1xf32>
    %96 = arith.divf %94, %95 : vector<16x1xf32>
    %97 = vector.broadcast %96 : vector<16x1xf32> to vector<16x32xf32>
    %98 = arith.subf %88, %97 : vector<16x32xf32>
    %99 = arith.mulf %98, %98 : vector<16x32xf32>
    %cst_30 = arith.constant dense<0.000000e+00> : vector<16xf32>
    %100 = vector.multi_reduction <add>, %99, %cst_30 [1] : vector<16x32xf32> to vector<16xf32>
    %101 = vector.shape_cast %100 : vector<16xf32> to vector<16x1xf32>
    %cst_31 = arith.constant 3.200000e+01 : f32
    %102 = vector.broadcast %cst_31 : f32 to vector<16x1xf32>
    %103 = arith.divf %101, %102 : vector<16x1xf32>
    %104 = vector.broadcast %96 : vector<16x1xf32> to vector<16x32xf32>
    %105 = arith.subf %88, %104 : vector<16x32xf32>
    %cst_32 = arith.constant 9.99999974E-6 : f32
    %106 = vector.broadcast %cst_32 : f32 to vector<16x1xf32>
    %107 = arith.addf %103, %106 : vector<16x1xf32>
    %108 = math.rsqrt %107 : vector<16x1xf32>
    %109 = vector.broadcast %108 : vector<16x1xf32> to vector<16x32xf32>
    %110 = arith.mulf %105, %109 : vector<16x32xf32>
    %111 = vector.broadcast %90 : vector<1x32xf32> to vector<16x32xf32>
    %112 = arith.mulf %110, %111 : vector<16x32xf32>
    %113 = vector.broadcast %92 : vector<1x32xf32> to vector<16x32xf32>
    %114 = arith.addf %112, %113 : vector<16x32xf32>
    %c0_33 = arith.constant 0 : index
    %c0_34 = arith.constant 0 : index
    %c0_35 = arith.constant 0 : index
    %115 = vector.load %arg7[%c0_33, %c0_34, %c0_35] : memref<2x32x64xf32, #tpu.memory_space<vmem>>, vector<1x32x64xf32>
    %116 = vector.shape_cast %115 : vector<1x32x64xf32> to vector<32x64xf32>
    %cst_36 = arith.constant dense<0.000000e+00> : vector<16x64xf32>
    %117 = tpu.matmul %114, %116, %cst_36 {dimension_numbers = #tpu.dot_dimension_numbers<[1], [0], [0], [1], [0, 0, 1, 1], [], []>} : vector<16x32xf32>, vector<32x64xf32>, vector<16x64xf32> -> vector<16x64xf32>
    %c0_37 = arith.constant 0 : index
    %c0_38 = arith.constant 0 : index
    %c0_39 = arith.constant 0 : index
    %118 = vector.load %arg8[%c0_37, %c0_38, %c0_39] : memref<2x1x64xf32, #tpu.memory_space<vmem>>, vector<1x1x64xf32>
    %119 = vector.shape_cast %118 : vector<1x1x64xf32> to vector<1x64xf32>
    %120 = vector.broadcast %119 : vector<1x64xf32> to vector<16x64xf32>
    %121 = arith.addf %117, %120 : vector<16x64xf32>
    %cst_40 = arith.constant 0.000000e+00 : f32
    %122 = vector.broadcast %cst_40 : f32 to vector<16x64xf32>
    %123 = arith.maximumf %121, %122 : vector<16x64xf32>
    %c0_41 = arith.constant 0 : index
    %c0_42 = arith.constant 0 : index
    %c0_43 = arith.constant 0 : index
    %124 = vector.load %arg9[%c0_41, %c0_42, %c0_43] : memref<2x64x32xf32, #tpu.memory_space<vmem>>, vector<1x64x32xf32>
    %125 = vector.shape_cast %124 : vector<1x64x32xf32> to vector<64x32xf32>
    %cst_44 = arith.constant dense<0.000000e+00> : vector<16x32xf32>
    %126 = tpu.matmul %123, %125, %cst_44 {dimension_numbers = #tpu.dot_dimension_numbers<[1], [0], [0], [1], [0, 0, 1, 1], [], []>} : vector<16x64xf32>, vector<64x32xf32>, vector<16x32xf32> -> vector<16x32xf32>
    %c0_45 = arith.constant 0 : index
    %c0_46 = arith.constant 0 : index
    %c0_47 = arith.constant 0 : index
    %127 = vector.load %arg10[%c0_45, %c0_46, %c0_47] : memref<2x1x32xf32, #tpu.memory_space<vmem>>, vector<1x1x32xf32>
    %128 = vector.shape_cast %127 : vector<1x1x32xf32> to vector<1x32xf32>
    %129 = vector.broadcast %128 : vector<1x32xf32> to vector<16x32xf32>
    %130 = arith.addf %126, %129 : vector<16x32xf32>
    %131 = arith.addf %114, %130 : vector<16x32xf32>
    %c0_48 = arith.constant 0 : index
    %c0_49 = arith.constant 0 : index
    %c0_50 = arith.constant 0 : index
    %132 = vector.load %arg13[%c0_48, %c0_49, %c0_50] : memref<2x1x32xf32, #tpu.memory_space<vmem>>, vector<1x1x32xf32>
    %133 = vector.shape_cast %132 : vector<1x1x32xf32> to vector<1x32xf32>
    %c0_51 = arith.constant 0 : index
    %c0_52 = arith.constant 0 : index
    %c0_53 = arith.constant 0 : index
    %134 = vector.load %arg14[%c0_51, %c0_52, %c0_53] : memref<2x1x32xf32, #tpu.memory_space<vmem>>, vector<1x1x32xf32>
    %135 = vector.shape_cast %134 : vector<1x1x32xf32> to vector<1x32xf32>
    %cst_54 = arith.constant dense<0.000000e+00> : vector<16xf32>
    %136 = vector.multi_reduction <add>, %131, %cst_54 [1] : vector<16x32xf32> to vector<16xf32>
    %137 = vector.shape_cast %136 : vector<16xf32> to vector<16x1xf32>
    %cst_55 = arith.constant 3.200000e+01 : f32
    %138 = vector.broadcast %cst_55 : f32 to vector<16x1xf32>
    %139 = arith.divf %137, %138 : vector<16x1xf32>
    %140 = vector.broadcast %139 : vector<16x1xf32> to vector<16x32xf32>
    %141 = arith.subf %131, %140 : vector<16x32xf32>
    %142 = arith.mulf %141, %141 : vector<16x32xf32>
    %cst_56 = arith.constant dense<0.000000e+00> : vector<16xf32>
    %143 = vector.multi_reduction <add>, %142, %cst_56 [1] : vector<16x32xf32> to vector<16xf32>
    %144 = vector.shape_cast %143 : vector<16xf32> to vector<16x1xf32>
    %cst_57 = arith.constant 3.200000e+01 : f32
    %145 = vector.broadcast %cst_57 : f32 to vector<16x1xf32>
    %146 = arith.divf %144, %145 : vector<16x1xf32>
    %147 = vector.broadcast %139 : vector<16x1xf32> to vector<16x32xf32>
    %148 = arith.subf %131, %147 : vector<16x32xf32>
    %cst_58 = arith.constant 9.99999974E-6 : f32
    %149 = vector.broadcast %cst_58 : f32 to vector<16x1xf32>
    %150 = arith.addf %146, %149 : vector<16x1xf32>
    %151 = math.rsqrt %150 : vector<16x1xf32>
    %152 = vector.broadcast %151 : vector<16x1xf32> to vector<16x32xf32>
    %153 = arith.mulf %148, %152 : vector<16x32xf32>
    %154 = vector.broadcast %133 : vector<1x32xf32> to vector<16x32xf32>
    %155 = arith.mulf %153, %154 : vector<16x32xf32>
    %156 = vector.broadcast %135 : vector<1x32xf32> to vector<16x32xf32>
    %157 = arith.addf %155, %156 : vector<16x32xf32>
    %c1 = arith.constant 1 : index
    %c0_59 = arith.constant 0 : index
    %c0_60 = arith.constant 0 : index
    %158 = vector.load %arg3[%c1, %c0_59, %c0_60] : memref<2x32x96xf32, #tpu.memory_space<vmem>>, vector<1x32x96xf32>
    %159 = vector.shape_cast %158 : vector<1x32x96xf32> to vector<32x96xf32>
    %cst_61 = arith.constant dense<0.000000e+00> : vector<16x96xf32>
    %160 = tpu.matmul %157, %159, %cst_61 {dimension_numbers = #tpu.dot_dimension_numbers<[1], [0], [0], [1], [0, 0, 1, 1], [], []>} : vector<16x32xf32>, vector<32x96xf32>, vector<16x96xf32> -> vector<16x96xf32>
    %c1_62 = arith.constant 1 : index
    %c0_63 = arith.constant 0 : index
    %c0_64 = arith.constant 0 : index
    %161 = vector.load %arg4[%c1_62, %c0_63, %c0_64] : memref<2x1x96xf32, #tpu.memory_space<vmem>>, vector<1x1x96xf32>
    %162 = vector.shape_cast %161 : vector<1x1x96xf32> to vector<1x96xf32>
    %163 = vector.broadcast %162 : vector<1x96xf32> to vector<16x96xf32>
    %164 = arith.addf %160, %163 : vector<16x96xf32>
    %165 = vector.extract_strided_slice %164 {offsets = [0, 0], sizes = [16, 8], strides = [1, 1]} : vector<16x96xf32> to vector<16x8xf32>
    %166 = vector.shape_cast %165 : vector<16x8xf32> to vector<2x8x8xf32>
    %167 = vector.extract_strided_slice %164 {offsets = [0, 8], sizes = [16, 8], strides = [1, 1]} : vector<16x96xf32> to vector<16x8xf32>
    %168 = vector.shape_cast %167 : vector<16x8xf32> to vector<2x8x8xf32>
    %169 = vector.extract_strided_slice %164 {offsets = [0, 16], sizes = [16, 8], strides = [1, 1]} : vector<16x96xf32> to vector<16x8xf32>
    %170 = vector.shape_cast %169 : vector<16x8xf32> to vector<2x8x8xf32>
    %171 = vector.extract_strided_slice %164 {offsets = [0, 24], sizes = [16, 8], strides = [1, 1]} : vector<16x96xf32> to vector<16x8xf32>
    %172 = vector.shape_cast %171 : vector<16x8xf32> to vector<2x8x8xf32>
    %173 = vector.shape_cast %166 : vector<2x8x8xf32> to vector<2x1x8x8xf32>
    %174 = vector.shape_cast %168 : vector<2x8x8xf32> to vector<2x1x8x8xf32>
    %175 = vector.shape_cast %170 : vector<2x8x8xf32> to vector<2x1x8x8xf32>
    %176 = vector.shape_cast %172 : vector<2x8x8xf32> to vector<2x1x8x8xf32>
    %177 = tpu.concatenate %173, %174, %175, %176 in 1 : vector<2x1x8x8xf32>, vector<2x1x8x8xf32>, vector<2x1x8x8xf32>, vector<2x1x8x8xf32> -> vector<2x4x8x8xf32>
    %178 = vector.shape_cast %177 : vector<2x4x8x8xf32> to vector<8x8x8xf32>
    %179 = vector.extract_strided_slice %164 {offsets = [0, 32], sizes = [16, 8], strides = [1, 1]} : vector<16x96xf32> to vector<16x8xf32>
    %180 = vector.shape_cast %179 : vector<16x8xf32> to vector<2x8x8xf32>
    %181 = vector.extract_strided_slice %164 {offsets = [0, 40], sizes = [16, 8], strides = [1, 1]} : vector<16x96xf32> to vector<16x8xf32>
    %182 = vector.shape_cast %181 : vector<16x8xf32> to vector<2x8x8xf32>
    %183 = vector.extract_strided_slice %164 {offsets = [0, 48], sizes = [16, 8], strides = [1, 1]} : vector<16x96xf32> to vector<16x8xf32>
    %184 = vector.shape_cast %183 : vector<16x8xf32> to vector<2x8x8xf32>
    %185 = vector.extract_strided_slice %164 {offsets = [0, 56], sizes = [16, 8], strides = [1, 1]} : vector<16x96xf32> to vector<16x8xf32>
    %186 = vector.shape_cast %185 : vector<16x8xf32> to vector<2x8x8xf32>
    %187 = vector.shape_cast %180 : vector<2x8x8xf32> to vector<2x1x8x8xf32>
    %188 = vector.shape_cast %182 : vector<2x8x8xf32> to vector<2x1x8x8xf32>
    %189 = vector.shape_cast %184 : vector<2x8x8xf32> to vector<2x1x8x8xf32>
    %190 = vector.shape_cast %186 : vector<2x8x8xf32> to vector<2x1x8x8xf32>
    %191 = tpu.concatenate %187, %188, %189, %190 in 1 : vector<2x1x8x8xf32>, vector<2x1x8x8xf32>, vector<2x1x8x8xf32>, vector<2x1x8x8xf32> -> vector<2x4x8x8xf32>
    %192 = vector.shape_cast %191 : vector<2x4x8x8xf32> to vector<8x8x8xf32>
    %193 = vector.extract_strided_slice %164 {offsets = [0, 64], sizes = [16, 8], strides = [1, 1]} : vector<16x96xf32> to vector<16x8xf32>
    %194 = vector.shape_cast %193 : vector<16x8xf32> to vector<2x8x8xf32>
    %195 = vector.extract_strided_slice %164 {offsets = [0, 72], sizes = [16, 8], strides = [1, 1]} : vector<16x96xf32> to vector<16x8xf32>
    %196 = vector.shape_cast %195 : vector<16x8xf32> to vector<2x8x8xf32>
    %197 = vector.extract_strided_slice %164 {offsets = [0, 80], sizes = [16, 8], strides = [1, 1]} : vector<16x96xf32> to vector<16x8xf32>
    %198 = vector.shape_cast %197 : vector<16x8xf32> to vector<2x8x8xf32>
    %199 = vector.extract_strided_slice %164 {offsets = [0, 88], sizes = [16, 8], strides = [1, 1]} : vector<16x96xf32> to vector<16x8xf32>
    %200 = vector.shape_cast %199 : vector<16x8xf32> to vector<2x8x8xf32>
    %201 = vector.shape_cast %194 : vector<2x8x8xf32> to vector<2x1x8x8xf32>
    %202 = vector.shape_cast %196 : vector<2x8x8xf32> to vector<2x1x8x8xf32>
    %203 = vector.shape_cast %198 : vector<2x8x8xf32> to vector<2x1x8x8xf32>
    %204 = vector.shape_cast %200 : vector<2x8x8xf32> to vector<2x1x8x8xf32>
    %205 = tpu.concatenate %201, %202, %203, %204 in 1 : vector<2x1x8x8xf32>, vector<2x1x8x8xf32>, vector<2x1x8x8xf32>, vector<2x1x8x8xf32> -> vector<2x4x8x8xf32>
    %206 = vector.shape_cast %205 : vector<2x4x8x8xf32> to vector<8x8x8xf32>
    "tpu.trace_start"() <{level = 10 : i32, message = "nqd,nkd->nqk"}> : () -> ()
    %cst_65 = arith.constant dense<0.000000e+00> : vector<8x8x8xf32>
    %207 = tpu.matmul %178, %192, %cst_65 {dimension_numbers = #tpu.dot_dimension_numbers<[2], [2], [1], [1], [0, 0, 0, 1, 1, 1], [0], [0]>} : vector<8x8x8xf32>, vector<8x8x8xf32>, vector<8x8x8xf32> -> vector<8x8x8xf32>
    "tpu.trace_stop"() : () -> ()
    %cst_66 = arith.constant dense<0xFF800000> : vector<8x8xf32>
    %208 = vector.multi_reduction <maximumf>, %207, %cst_66 [2] : vector<8x8x8xf32> to vector<8x8xf32>
    %209 = vector.shape_cast %208 : vector<8x8xf32> to vector<8x8x1xf32>
    %210 = vector.broadcast %209 : vector<8x8x1xf32> to vector<8x8x8xf32>
    %211 = arith.subf %207, %210 : vector<8x8x8xf32>
    %212 = math.exp %211 : vector<8x8x8xf32>
    %cst_67 = arith.constant dense<0.000000e+00> : vector<8x8xf32>
    %213 = vector.multi_reduction <add>, %212, %cst_67 [2] : vector<8x8x8xf32> to vector<8x8xf32>
    %214 = vector.shape_cast %213 : vector<8x8xf32> to vector<8x8x1xf32>
    %215 = tpu.reciprocal %214 {approx = true} : vector<8x8x1xf32> -> vector<8x8x1xf32>
    %216 = vector.broadcast %215 : vector<8x8x1xf32> to vector<8x8x8xf32>
    %217 = arith.mulf %212, %216 : vector<8x8x8xf32>
    "tpu.trace_start"() <{level = 10 : i32, message = "nqk,nkd->nqd"}> : () -> ()
    %cst_68 = arith.constant dense<0.000000e+00> : vector<8x8x8xf32>
    %218 = tpu.matmul %217, %206, %cst_68 {dimension_numbers = #tpu.dot_dimension_numbers<[2], [1], [1], [2], [0, 0, 0, 1, 1, 2], [0], [0]>} : vector<8x8x8xf32>, vector<8x8x8xf32>, vector<8x8x8xf32> -> vector<8x8x8xf32>
    "tpu.trace_stop"() : () -> ()
    %c1_69 = arith.constant 1 : index
    %c0_70 = arith.constant 0 : index
    %c0_71 = arith.constant 0 : index
    %c0_72 = arith.constant 0 : index
    %219 = vector.load %arg5[%c1_69, %c0_70, %c0_71, %c0_72] : memref<2x4x8x32xf32, #tpu.memory_space<vmem>>, vector<1x4x8x32xf32>
    %220 = vector.shape_cast %219 : vector<1x4x8x32xf32> to vector<4x8x32xf32>
    %221 = tpu.concatenate %220, %220 in 0 : vector<4x8x32xf32>, vector<4x8x32xf32> -> vector<8x8x32xf32>
    "tpu.trace_start"() <{level = 10 : i32, message = "nsd,ndf->nsf"}> : () -> ()
    %cst_73 = arith.constant dense<0.000000e+00> : vector<8x8x32xf32>
    %222 = tpu.matmul %218, %221, %cst_73 {dimension_numbers = #tpu.dot_dimension_numbers<[2], [1], [1], [2], [0, 0, 0, 1, 1, 2], [0], [0]>} : vector<8x8x8xf32>, vector<8x8x32xf32>, vector<8x8x32xf32> -> vector<8x8x32xf32>
    "tpu.trace_stop"() : () -> ()
    %223 = vector.shape_cast %222 : vector<8x8x32xf32> to vector<2x4x8x32xf32>
    %224 = vector.extract_strided_slice %223 {offsets = [0, 0, 0, 0], sizes = [2, 1, 8, 32], strides = [1, 1, 1, 1]} : vector<2x4x8x32xf32> to vector<2x1x8x32xf32>
    %225 = vector.shape_cast %224 : vector<2x1x8x32xf32> to vector<2x8x32xf32>
    %226 = vector.extract_strided_slice %223 {offsets = [0, 1, 0, 0], sizes = [2, 1, 8, 32], strides = [1, 1, 1, 1]} : vector<2x4x8x32xf32> to vector<2x1x8x32xf32>
    %227 = vector.shape_cast %226 : vector<2x1x8x32xf32> to vector<2x8x32xf32>
    %228 = arith.addf %225, %227 : vector<2x8x32xf32>
    %229 = vector.extract_strided_slice %223 {offsets = [0, 2, 0, 0], sizes = [2, 1, 8, 32], strides = [1, 1, 1, 1]} : vector<2x4x8x32xf32> to vector<2x1x8x32xf32>
    %230 = vector.shape_cast %229 : vector<2x1x8x32xf32> to vector<2x8x32xf32>
    %231 = arith.addf %228, %230 : vector<2x8x32xf32>
    %232 = vector.extract_strided_slice %223 {offsets = [0, 3, 0, 0], sizes = [2, 1, 8, 32], strides = [1, 1, 1, 1]} : vector<2x4x8x32xf32> to vector<2x1x8x32xf32>
    %233 = vector.shape_cast %232 : vector<2x1x8x32xf32> to vector<2x8x32xf32>
    %234 = arith.addf %231, %233 : vector<2x8x32xf32>
    %235 = vector.shape_cast %234 : vector<2x8x32xf32> to vector<16x32xf32>
    %c1_74 = arith.constant 1 : index
    %c0_75 = arith.constant 0 : index
    %c0_76 = arith.constant 0 : index
    %236 = vector.load %arg6[%c1_74, %c0_75, %c0_76] : memref<2x1x32xf32, #tpu.memory_space<vmem>>, vector<1x1x32xf32>
    %237 = vector.shape_cast %236 : vector<1x1x32xf32> to vector<1x32xf32>
    %238 = vector.broadcast %237 : vector<1x32xf32> to vector<16x32xf32>
    %239 = arith.addf %235, %238 : vector<16x32xf32>
    %240 = arith.addf %157, %239 : vector<16x32xf32>
    %c1_77 = arith.constant 1 : index
    %c0_78 = arith.constant 0 : index
    %c0_79 = arith.constant 0 : index
    %241 = vector.load %arg11[%c1_77, %c0_78, %c0_79] : memref<2x1x32xf32, #tpu.memory_space<vmem>>, vector<1x1x32xf32>
    %242 = vector.shape_cast %241 : vector<1x1x32xf32> to vector<1x32xf32>
    %c1_80 = arith.constant 1 : index
    %c0_81 = arith.constant 0 : index
    %c0_82 = arith.constant 0 : index
    %243 = vector.load %arg12[%c1_80, %c0_81, %c0_82] : memref<2x1x32xf32, #tpu.memory_space<vmem>>, vector<1x1x32xf32>
    %244 = vector.shape_cast %243 : vector<1x1x32xf32> to vector<1x32xf32>
    %cst_83 = arith.constant dense<0.000000e+00> : vector<16xf32>
    %245 = vector.multi_reduction <add>, %240, %cst_83 [1] : vector<16x32xf32> to vector<16xf32>
    %246 = vector.shape_cast %245 : vector<16xf32> to vector<16x1xf32>
    %cst_84 = arith.constant 3.200000e+01 : f32
    %247 = vector.broadcast %cst_84 : f32 to vector<16x1xf32>
    %248 = arith.divf %246, %247 : vector<16x1xf32>
    %249 = vector.broadcast %248 : vector<16x1xf32> to vector<16x32xf32>
    %250 = arith.subf %240, %249 : vector<16x32xf32>
    %251 = arith.mulf %250, %250 : vector<16x32xf32>
    %cst_85 = arith.constant dense<0.000000e+00> : vector<16xf32>
    %252 = vector.multi_reduction <add>, %251, %cst_85 [1] : vector<16x32xf32> to vector<16xf32>
    %253 = vector.shape_cast %252 : vector<16xf32> to vector<16x1xf32>
    %cst_86 = arith.constant 3.200000e+01 : f32
    %254 = vector.broadcast %cst_86 : f32 to vector<16x1xf32>
    %255 = arith.divf %253, %254 : vector<16x1xf32>
    %256 = vector.broadcast %248 : vector<16x1xf32> to vector<16x32xf32>
    %257 = arith.subf %240, %256 : vector<16x32xf32>
    %cst_87 = arith.constant 9.99999974E-6 : f32
    %258 = vector.broadcast %cst_87 : f32 to vector<16x1xf32>
    %259 = arith.addf %255, %258 : vector<16x1xf32>
    %260 = math.rsqrt %259 : vector<16x1xf32>
    %261 = vector.broadcast %260 : vector<16x1xf32> to vector<16x32xf32>
    %262 = arith.mulf %257, %261 : vector<16x32xf32>
    %263 = vector.broadcast %242 : vector<1x32xf32> to vector<16x32xf32>
    %264 = arith.mulf %262, %263 : vector<16x32xf32>
    %265 = vector.broadcast %244 : vector<1x32xf32> to vector<16x32xf32>
    %266 = arith.addf %264, %265 : vector<16x32xf32>
    %c1_88 = arith.constant 1 : index
    %c0_89 = arith.constant 0 : index
    %c0_90 = arith.constant 0 : index
    %267 = vector.load %arg7[%c1_88, %c0_89, %c0_90] : memref<2x32x64xf32, #tpu.memory_space<vmem>>, vector<1x32x64xf32>
    %268 = vector.shape_cast %267 : vector<1x32x64xf32> to vector<32x64xf32>
    %cst_91 = arith.constant dense<0.000000e+00> : vector<16x64xf32>
    %269 = tpu.matmul %266, %268, %cst_91 {dimension_numbers = #tpu.dot_dimension_numbers<[1], [0], [0], [1], [0, 0, 1, 1], [], []>} : vector<16x32xf32>, vector<32x64xf32>, vector<16x64xf32> -> vector<16x64xf32>
    %c1_92 = arith.constant 1 : index
    %c0_93 = arith.constant 0 : index
    %c0_94 = arith.constant 0 : index
    %270 = vector.load %arg8[%c1_92, %c0_93, %c0_94] : memref<2x1x64xf32, #tpu.memory_space<vmem>>, vector<1x1x64xf32>
    %271 = vector.shape_cast %270 : vector<1x1x64xf32> to vector<1x64xf32>
    %272 = vector.broadcast %271 : vector<1x64xf32> to vector<16x64xf32>
    %273 = arith.addf %269, %272 : vector<16x64xf32>
    %cst_95 = arith.constant 0.000000e+00 : f32
    %274 = vector.broadcast %cst_95 : f32 to vector<16x64xf32>
    %275 = arith.maximumf %273, %274 : vector<16x64xf32>
    %c1_96 = arith.constant 1 : index
    %c0_97 = arith.constant 0 : index
    %c0_98 = arith.constant 0 : index
    %276 = vector.load %arg9[%c1_96, %c0_97, %c0_98] : memref<2x64x32xf32, #tpu.memory_space<vmem>>, vector<1x64x32xf32>
    %277 = vector.shape_cast %276 : vector<1x64x32xf32> to vector<64x32xf32>
    %cst_99 = arith.constant dense<0.000000e+00> : vector<16x32xf32>
    %278 = tpu.matmul %275, %277, %cst_99 {dimension_numbers = #tpu.dot_dimension_numbers<[1], [0], [0], [1], [0, 0, 1, 1], [], []>} : vector<16x64xf32>, vector<64x32xf32>, vector<16x32xf32> -> vector<16x32xf32>
    %c1_100 = arith.constant 1 : index
    %c0_101 = arith.constant 0 : index
    %c0_102 = arith.constant 0 : index
    %279 = vector.load %arg10[%c1_100, %c0_101, %c0_102] : memref<2x1x32xf32, #tpu.memory_space<vmem>>, vector<1x1x32xf32>
    %280 = vector.shape_cast %279 : vector<1x1x32xf32> to vector<1x32xf32>
    %281 = vector.broadcast %280 : vector<1x32xf32> to vector<16x32xf32>
    %282 = arith.addf %278, %281 : vector<16x32xf32>
    %283 = arith.addf %266, %282 : vector<16x32xf32>
    %c1_103 = arith.constant 1 : index
    %c0_104 = arith.constant 0 : index
    %c0_105 = arith.constant 0 : index
    %284 = vector.load %arg13[%c1_103, %c0_104, %c0_105] : memref<2x1x32xf32, #tpu.memory_space<vmem>>, vector<1x1x32xf32>
    %285 = vector.shape_cast %284 : vector<1x1x32xf32> to vector<1x32xf32>
    %c1_106 = arith.constant 1 : index
    %c0_107 = arith.constant 0 : index
    %c0_108 = arith.constant 0 : index
    %286 = vector.load %arg14[%c1_106, %c0_107, %c0_108] : memref<2x1x32xf32, #tpu.memory_space<vmem>>, vector<1x1x32xf32>
    %287 = vector.shape_cast %286 : vector<1x1x32xf32> to vector<1x32xf32>
    %cst_109 = arith.constant dense<0.000000e+00> : vector<16xf32>
    %288 = vector.multi_reduction <add>, %283, %cst_109 [1] : vector<16x32xf32> to vector<16xf32>
    %289 = vector.shape_cast %288 : vector<16xf32> to vector<16x1xf32>
    %cst_110 = arith.constant 3.200000e+01 : f32
    %290 = vector.broadcast %cst_110 : f32 to vector<16x1xf32>
    %291 = arith.divf %289, %290 : vector<16x1xf32>
    %292 = vector.broadcast %291 : vector<16x1xf32> to vector<16x32xf32>
    %293 = arith.subf %283, %292 : vector<16x32xf32>
    %294 = arith.mulf %293, %293 : vector<16x32xf32>
    %cst_111 = arith.constant dense<0.000000e+00> : vector<16xf32>
    %295 = vector.multi_reduction <add>, %294, %cst_111 [1] : vector<16x32xf32> to vector<16xf32>
    %296 = vector.shape_cast %295 : vector<16xf32> to vector<16x1xf32>
    %cst_112 = arith.constant 3.200000e+01 : f32
    %297 = vector.broadcast %cst_112 : f32 to vector<16x1xf32>
    %298 = arith.divf %296, %297 : vector<16x1xf32>
    %299 = vector.broadcast %291 : vector<16x1xf32> to vector<16x32xf32>
    %300 = arith.subf %283, %299 : vector<16x32xf32>
    %cst_113 = arith.constant 9.99999974E-6 : f32
    %301 = vector.broadcast %cst_113 : f32 to vector<16x1xf32>
    %302 = arith.addf %298, %301 : vector<16x1xf32>
    %303 = math.rsqrt %302 : vector<16x1xf32>
    %304 = vector.broadcast %303 : vector<16x1xf32> to vector<16x32xf32>
    %305 = arith.mulf %300, %304 : vector<16x32xf32>
    %306 = vector.broadcast %285 : vector<1x32xf32> to vector<16x32xf32>
    %307 = arith.mulf %305, %306 : vector<16x32xf32>
    %308 = vector.broadcast %287 : vector<1x32xf32> to vector<16x32xf32>
    %309 = arith.addf %307, %308 : vector<16x32xf32>
    %310 = vector.shape_cast %309 : vector<16x32xf32> to vector<2x8x32xf32>
    %c0_114 = arith.constant 0 : index
    %c0_115 = arith.constant 0 : index
    %c0_116 = arith.constant 0 : index
    %311 = vector.load %arg15[%c0_114, %c0_115, %c0_116] : memref<2x8x32xf32, #tpu.memory_space<vmem>>, vector<2x8x32xf32>
    tpu.vector_store %arg15[%c0_114, %c0_115, %c0_116], %310 {strides = array<i32>} : memref<2x8x32xf32, #tpu.memory_space<vmem>>, vector<2x8x32xf32>,
    return
  }
  func.func @transform_0(%arg0: i32) -> (i32, i32, i32) {
    %c0_i32 = arith.constant 0 : i32
    %c0_i32_0 = arith.constant 0 : i32
    %c0_i32_1 = arith.constant 0 : i32
    %c0_i32_2 = arith.constant 0 : i32
    return %c0_i32, %c0_i32_0, %c0_i32_1 : i32, i32, i32
  }
  func.func @transform_1(%arg0: i32) -> (i32, i32) {
    %c0_i32 = arith.constant 0 : i32
    %c0_i32_0 = arith.constant 0 : i32
    %c0_i32_1 = arith.constant 0 : i32
    return %c0_i32, %c0_i32_0 : i32, i32
  }
  func.func @transform_2(%arg0: i32) -> (i32, i32, i32) {
    %c0_i32 = arith.constant 0 : i32
    %c0_i32_0 = arith.constant 0 : i32
    %c0_i32_1 = arith.constant 0 : i32
    %c0_i32_2 = arith.constant 0 : i32
    return %c0_i32, %c0_i32_0, %c0_i32_1 : i32, i32, i32
  }
  func.func @transform_3(%arg0: i32) -> (i32, i32, i32) {
    %c0_i32 = arith.constant 0 : i32
    %c0_i32_0 = arith.constant 0 : i32
    %c0_i32_1 = arith.constant 0 : i32
    %c0_i32_2 = arith.constant 0 : i32
    return %c0_i32, %c0_i32_0, %c0_i32_1 : i32, i32, i32
  }
  func.func @transform_4(%arg0: i32) -> (i32, i32, i32, i32) {
    %c0_i32 = arith.constant 0 : i32
    %c0_i32_0 = arith.constant 0 : i32
    %c0_i32_1 = arith.constant 0 : i32
    %c0_i32_2 = arith.constant 0 : i32
    %c0_i32_3 = arith.constant 0 : i32
    return %c0_i32, %c0_i32_0, %c0_i32_1, %c0_i32_2 : i32, i32, i32, i32
  }
  func.func @transform_5(%arg0: i32) -> (i32, i32, i32) {
    %c0_i32 = arith.constant 0 : i32
    %c0_i32_0 = arith.constant 0 : i32
    %c0_i32_1 = arith.constant 0 : i32
    %c0_i32_2 = arith.constant 0 : i32
    return %c0_i32, %c0_i32_0, %c0_i32_1 : i32, i32, i32
  }
  func.func @transform_6(%arg0: i32) -> (i32, i32, i32) {
    %c0_i32 = arith.constant 0 : i32
    %c0_i32_0 = arith.constant 0 : i32
    %c0_i32_1 = arith.constant 0 : i32
    %c0_i32_2 = arith.constant 0 : i32
    return %c0_i32, %c0_i32_0, %c0_i32_1 : i32, i32, i32
  }
  func.func @transform_7(%arg0: i32) -> (i32, i32, i32) {
    %c0_i32 = arith.constant 0 : i32
    %c0_i32_0 = arith.constant 0 : i32
    %c0_i32_1 = arith.constant 0 : i32
    %c0_i32_2 = arith.constant 0 : i32
    return %c0_i32, %c0_i32_0, %c0_i32_1 : i32, i32, i32
  }
  func.func @transform_8(%arg0: i32) -> (i32, i32, i32) {
    %c0_i32 = arith.constant 0 : i32
    %c0_i32_0 = arith.constant 0 : i32
    %c0_i32_1 = arith.constant 0 : i32
    %c0_i32_2 = arith.constant 0 : i32
    return %c0_i32, %c0_i32_0, %c0_i32_1 : i32, i32, i32
  }
  func.func @transform_9(%arg0: i32) -> (i32, i32, i32) {
    %c0_i32 = arith.constant 0 : i32
    %c0_i32_0 = arith.constant 0 : i32
    %c0_i32_1 = arith.constant 0 : i32
    %c0_i32_2 = arith.constant 0 : i32
    return %c0_i32, %c0_i32_0, %c0_i32_1 : i32, i32, i32
  }
  func.func @transform_10(%arg0: i32) -> (i32, i32, i32) {
    %c0_i32 = arith.constant 0 : i32
    %c0_i32_0 = arith.constant 0 : i32
    %c0_i32_1 = arith.constant 0 : i32
    %c0_i32_2 = arith.constant 0 : i32
    return %c0_i32, %c0_i32_0, %c0_i32_1 : i32, i32, i32
  }
  func.func @transform_11(%arg0: i32) -> (i32, i32, i32) {
    %c0_i32 = arith.constant 0 : i32
    %c0_i32_0 = arith.constant 0 : i32
    %c0_i32_1 = arith.constant 0 : i32
    %c0_i32_2 = arith.constant 0 : i32
    return %c0_i32, %c0_i32_0, %c0_i32_1 : i32, i32, i32
  }
  func.func @transform_12(%arg0: i32) -> (i32, i32, i32) {
    %c0_i32 = arith.constant 0 : i32
    %c0_i32_0 = arith.constant 0 : i32
    %c0_i32_1 = arith.constant 0 : i32
    %c0_i32_2 = arith.constant 0 : i32
    return %c0_i32, %c0_i32_0, %c0_i32_1 : i32, i32, i32
  }
  func.func @transform_13(%arg0: i32) -> (i32, i32, i32) {
    %c0_i32 = arith.constant 0 : i32
    %c0_i32_0 = arith.constant 0 : i32
    %c0_i32_1 = arith.constant 0 : i32
    %c0_i32_2 = arith.constant 0 : i32
    return %c0_i32, %c0_i32_0, %c0_i32_1 : i32, i32, i32
  }
  func.func @transform_14(%arg0: i32) -> (i32, i32, i32) {
    %c0_i32 = arith.constant 0 : i32
    %c0_i32_0 = arith.constant 0 : i32
    %c0_i32_1 = arith.constant 0 : i32
    %c0_i32_2 = arith.constant 0 : i32
    return %c0_i32, %c0_i32_0, %c0_i32_1 : i32, i32, i32
  }
}

</mosaic_0001>

<llo_original>
// kernel: tpu_custom_call.1
$region0: #{tpu_custom_call.1}
  #allocation0 [shape = 'u32[]', space=smem, size = 0x4, offset = 0x4, fixed_abs, tag = 'smem constant byte address 0x4 - core index']
  #allocation1 [shape = 'u32[72,128]{1,0:T(1,128)}', space=vmem, size = 0x9000, scoped, tag = 'internal scratch']
  %s0 = inlined_call_operand.hbm [shape: f32[2,8,32], index: 0, kind: input, shape index: {}]
  %s1 = inlined_call_operand.hbm [shape: f32[8,32], index: 1, kind: input, shape index: {}]
  %s2 = inlined_call_operand.vmem [shape: f32[2,32,96], index: 2, kind: input, shape index: {}]
  %s3 = inlined_call_operand.vmem [shape: f32[2,1,96], index: 3, kind: input, shape index: {}]
  %s4 = inlined_call_operand.vmem [shape: f32[2,4,8,32], index: 4, kind: input, shape index: {}]
  %s5 = inlined_call_operand.hbm [shape: f32[2,1,32], index: 5, kind: input, shape index: {}]
  %s6 = inlined_call_operand.vmem [shape: f32[2,32,64], index: 6, kind: input, shape index: {}]
  %s7 = inlined_call_operand.vmem [shape: f32[2,1,64], index: 7, kind: input, shape index: {}]
  %s8 = inlined_call_operand.vmem [shape: f32[2,64,32], index: 8, kind: input, shape index: {}]
  %s9 = inlined_call_operand.vmem [shape: f32[2,1,32], index: 9, kind: input, shape index: {}]
  %s10 = inlined_call_operand.vmem [shape: f32[2,1,32], index: 10, kind: input, shape index: {}]
  %s11 = inlined_call_operand.hbm [shape: f32[2,1,32], index: 11, kind: input, shape index: {}]
  %s12 = inlined_call_operand.vmem [shape: f32[2,1,32], index: 12, kind: input, shape index: {}]
  %s13 = inlined_call_operand.hbm [shape: f32[2,1,32], index: 13, kind: input, shape index: {}]
  %s14 = inlined_call_operand.hbm [shape: f32[2,8,32], index: 14, kind: output, shape index: {}]
  %s15 = sld [smem:[#allocation0]]
  $region86: #{tpu_custom_call.1} parent=0
    _
  %s17 = ssub.s32 1, %s15
  %s18 = scalar_select 0, %s17, %s15
  $region1: #{tpu_custom_call.1} parent=0
    #allocation2 [shape = 'u8[8192]{0}', space=vmem, size = 0x2000, scoped, tag = 'input window, operand 0, single buffered']
    #allocation3 [shape = 's32[1]{0}', space=sflag, size = 0x4, scoped, tag = 'scoped memory for tpu_custom_call.1']
    #allocation4 [shape = 's32[1]{0}', space=sflag, size = 0x4, scoped, tag = 'scoped memory for tpu_custom_call.1']
    #allocation5 [shape = 'u8[4096]{0}', space=vmem, size = 0x1000, scoped, tag = 'input window, operand 1, single buffered']
    #allocation6 [shape = 's32[1]{0}', space=sflag, size = 0x4, scoped, tag = 'scoped memory for tpu_custom_call.1']
    #allocation7 [shape = 'u8[1024]{0}', space=vmem, size = 0x400, scoped, tag = 'input window, operand 5, single buffered']
    #allocation8 [shape = 'u8[1024]{0}', space=vmem, size = 0x400, scoped, tag = 'input window, operand 11, single buffered']
    #allocation9 [shape = 's32[1]{0}', space=sflag, size = 0x4, scoped, tag = 'scoped memory for tpu_custom_call.1']
    #allocation10 [shape = 'u8[1024]{0}', space=vmem, size = 0x400, scoped, tag = 'input window, operand 13, single buffered']
    #allocation11 [shape = 'u8[8192]{0}', space=vmem, size = 0x2000, scoped, tag = 'output window, operand 0, single buffered']
    %19 = vsyncpa [#allocation3], 0
    %20 = vsyncpa [#allocation6], 0
    %21 = vsyncpa [#allocation9], 0
    %22 = vsyncpa [#allocation4], 0
    // Predicated region
    $region2: #{tpu_custom_call.1} parent=1 // pred_check
      _
    $region3: #{tpu_custom_call.1} parent=1 // pred_check_branch
      %24 = sbr.rel (0) target = $region5
    $region4: #{tpu_custom_call.1} parent=1 // pred_region
      %26 = vsyncadd [#allocation3], 0
      %s27 = sshll.u32 %s0, 4
      %s28 = int_to_ptr.hbm [resolvable:$true] %s27
      %s29 = sshll.u32 [#allocation2], 4
      %s30 = int_to_ptr.vmem [resolvable:$true] %s29
      %35 = dma.hbm_to_vmem [thread:$0]  %s28, 256, %s30, [#allocation3], 128, 128, 8
    $region5: #{tpu_custom_call.1} parent=1 // pred_fallthru
      _
    // Predicated region
    $region6: #{tpu_custom_call.1} parent=1 // pred_check
      _
    $region7: #{tpu_custom_call.1} parent=1 // pred_check_branch
      %37 = sbr.rel (0) target = $region9
    $region8: #{tpu_custom_call.1} parent=1 // pred_region
      %39 = vsyncadd [#allocation6], 0
      %s41 = sshll.u32 %s1, 4
      %s42 = int_to_ptr.hbm [resolvable:$true] %s41
      %s43 = sshll.u32 [#allocation5], 4
      %s44 = int_to_ptr.vmem [resolvable:$true] %s43
      %46 = dma.hbm_to_vmem [thread:$0]  %s42, 128, %s44, [#allocation6]
    $region9: #{tpu_custom_call.1} parent=1 // pred_fallthru
      _
    // Predicated region
    $region10: #{tpu_custom_call.1} parent=1 // pred_check
      _
    $region11: #{tpu_custom_call.1} parent=1 // pred_check_branch
      %48 = sbr.rel (0) target = $region13
    $region12: #{tpu_custom_call.1} parent=1 // pred_region
      _
    $region13: #{tpu_custom_call.1} parent=1 // pred_fallthru
      _
    // Predicated region
    $region14: #{tpu_custom_call.1} parent=1 // pred_check
      _
    $region15: #{tpu_custom_call.1} parent=1 // pred_check_branch
      %50 = sbr.rel (0) target = $region17
    $region16: #{tpu_custom_call.1} parent=1 // pred_region
      _
    $region17: #{tpu_custom_call.1} parent=1 // pred_fallthru
      _
    // Predicated region
    $region18: #{tpu_custom_call.1} parent=1 // pred_check
      _
    $region19: #{tpu_custom_call.1} parent=1 // pred_check_branch
      %52 = sbr.rel (0) target = $region21
    $region20: #{tpu_custom_call.1} parent=1 // pred_region
      _
    $region21: #{tpu_custom_call.1} parent=1 // pred_fallthru
      _
    // Predicated region
    $region22: #{tpu_custom_call.1} parent=1 // pred_check
      _
    $region23: #{tpu_custom_call.1} parent=1 // pred_check_branch
      %54 = sbr.rel (0) target = $region25
    $region24: #{tpu_custom_call.1} parent=1 // pred_region
      %56 = vsyncadd [#allocation6], 0
      %s57 = sshll.u32 %s5, 4
      %s58 = int_to_ptr.hbm [resolvable:$true] %s57
      %s59 = sshll.u32 [#allocation7], 4
      %s60 = int_to_ptr.vmem [resolvable:$true] %s59
      %65 = dma.hbm_to_vmem [thread:$0]  %s58, 32, %s60, [#allocation6], 16, 16, 1
    $region25: #{tpu_custom_call.1} parent=1 // pred_fallthru
      _
    // Predicated region
    $region26: #{tpu_custom_call.1} parent=1 // pred_check
      _
    $region27: #{tpu_custom_call.1} parent=1 // pred_check_branch
      %67 = sbr.rel (0) target = $region29
    $region28: #{tpu_custom_call.1} parent=1 // pred_region
      _
    $region29: #{tpu_custom_call.1} parent=1 // pred_fallthru
      _
    // Predicated region
    $region30: #{tpu_custom_call.1} parent=1 // pred_check
      _
    $region31: #{tpu_custom_call.1} parent=1 // pred_check_branch
      %69 = sbr.rel (0) target = $region33
    $region32: #{tpu_custom_call.1} parent=1 // pred_region
      _
    $region33: #{tpu_custom_call.1} parent=1 // pred_fallthru
      _
    // Predicated region
    $region34: #{tpu_custom_call.1} parent=1 // pred_check
      _
    $region35: #{tpu_custom_call.1} parent=1 // pred_check_branch
      %71 = sbr.rel (0) target = $region37
    $region36: #{tpu_custom_call.1} parent=1 // pred_region
      _
    $region37: #{tpu_custom_call.1} parent=1 // pred_fallthru
      _
    // Predicated region
    $region38: #{tpu_custom_call.1} parent=1 // pred_check
      _
    $region39: #{tpu_custom_call.1} parent=1 // pred_check_branch
      %73 = sbr.rel (0) target = $region41
    $region40: #{tpu_custom_call.1} parent=1 // pred_region
      _
    $region41: #{tpu_custom_call.1} parent=1 // pred_fallthru
      _
    // Predicated region
    $region42: #{tpu_custom_call.1} parent=1 // pred_check
      _
    $region43: #{tpu_custom_call.1} parent=1 // pred_check_branch
      %75 = sbr.rel (0) target = $region45
    $region44: #{tpu_custom_call.1} parent=1 // pred_region
      _
    $region45: #{tpu_custom_call.1} parent=1 // pred_fallthru
      _
    // Predicated region
    $region46: #{tpu_custom_call.1} parent=1 // pred_check
      _
    $region47: #{tpu_custom_call.1} parent=1 // pred_check_branch
      %77 = sbr.rel (0) target = $region49
    $region48: #{tpu_custom_call.1} parent=1 // pred_region
      %79 = vsyncadd [#allocation9], 0
      %s80 = sshll.u32 %s11, 4
      %s81 = int_to_ptr.hbm [resolvable:$true] %s80
      %s82 = sshll.u32 [#allocation8], 4
      %s83 = int_to_ptr.vmem [resolvable:$true] %s82
      %88 = dma.hbm_to_vmem [thread:$0]  %s81, 32, %s83, [#allocation9], 16, 16, 1
    $region49: #{tpu_custom_call.1} parent=1 // pred_fallthru
      _
    // Predicated region
    $region50: #{tpu_custom_call.1} parent=1 // pred_check
      _
    $region51: #{tpu_custom_call.1} parent=1 // pred_check_branch
      %90 = sbr.rel (0) target = $region53
    $region52: #{tpu_custom_call.1} parent=1 // pred_region
      _
    $region53: #{tpu_custom_call.1} parent=1 // pred_fallthru
      _
    // Predicated region
    $region54: #{tpu_custom_call.1} parent=1 // pred_check
      _
    $region55: #{tpu_custom_call.1} parent=1 // pred_check_branch
      %92 = sbr.rel (0) target = $region57
    $region56: #{tpu_custom_call.1} parent=1 // pred_region
      %94 = vsyncadd [#allocation9], 0
      %s95 = sshll.u32 %s13, 4
      %s96 = int_to_ptr.hbm [resolvable:$true] %s95
      %s97 = sshll.u32 [#allocation10], 4
      %s98 = int_to_ptr.vmem [resolvable:$true] %s97
      %103 = dma.hbm_to_vmem [thread:$0]  %s96, 32, %s98, [#allocation9], 16, 16, 1
    $region57: #{tpu_custom_call.1} parent=1 // pred_fallthru
      _
    // Predicated region
    $region58: #{tpu_custom_call.1} parent=1 // pred_check
      _
    $region59: #{tpu_custom_call.1} parent=1 // pred_check_branch
      %105 = sbr.rel (0) target = $region61
    $region60: #{tpu_custom_call.1} parent=1 // pred_region
      %107 = dma.done [#allocation3], 256
    $region61: #{tpu_custom_call.1} parent=1 // pred_fallthru
      _
    // Predicated region
    $region62: #{tpu_custom_call.1} parent=1 // pred_check
      _
    $region63: #{tpu_custom_call.1} parent=1 // pred_check_branch
      %109 = sbr.rel (0) target = $region65
    $region64: #{tpu_custom_call.1} parent=1 // pred_region
      %111 = dma.done [#allocation6], 128
    $region65: #{tpu_custom_call.1} parent=1 // pred_fallthru
      _
    // Predicated region
    $region66: #{tpu_custom_call.1} parent=1 // pred_check
      _
    $region67: #{tpu_custom_call.1} parent=1 // pred_check_branch
      %113 = sbr.rel (0) target = $region69
    $region68: #{tpu_custom_call.1} parent=1 // pred_region
      %115 = dma.done [#allocation6], 32
    $region69: #{tpu_custom_call.1} parent=1 // pred_fallthru
      _
    // Predicated region
    $region70: #{tpu_custom_call.1} parent=1 // pred_check
      _
    $region71: #{tpu_custom_call.1} parent=1 // pred_check_branch
      %117 = sbr.rel (0) target = $region73
    $region72: #{tpu_custom_call.1} parent=1 // pred_region
      %119 = dma.done [#allocation9], 32
    $region73: #{tpu_custom_call.1} parent=1 // pred_fallthru
      _
    // Predicated region
    $region74: #{tpu_custom_call.1} parent=1 // pred_check
      _
    $region75: #{tpu_custom_call.1} parent=1 // pred_check_branch
      %121 = sbr.rel (0) target = $region77
    $region76: #{tpu_custom_call.1} parent=1 // pred_region
      %123 = dma.done [#allocation9], 32
    $region77: #{tpu_custom_call.1} parent=1 // pred_fallthru
      _
    %v124 = vld [vmem:[#allocation2] sm:$0xff]
    %v125 = vld [vmem:[#allocation2 + $0x8] sm:$0xff]
    %v126 = vld [vmem:[#allocation5] sm:$0xff]
    %v127 = vadd.f32 %v124, %v126
    %v128 = vadd.f32 %v125, %v126
    %v129 = vld [vmem:[%s2] sm:$0xff]
    %v130 = vld [vmem:[%s2 + $0x8] sm:$0xff]
    %v131 = vld [vmem:[%s2 + $0x10] sm:$0xff]
    %v132 = vld [vmem:[%s2 + $0x18] sm:$0xff]
    %v133 = vld [vmem:[%s3] sm:$0x1]
    %v135 = vperm.slane %v133, 0
    %vm137 = vcmask 261120
    %v139 = vsel %vm137, %v127, 0
    %v142 = vsel %vm137, %v128, 0
    %144 = vmatpush.msra.mxu0 0.0
    %145 = vmatpush.msra.mxu0 0.0
    %146 = vmatpush.msra.mxu0 0.0
    %147 = vmatpush.msra.mxu0 0.0
    %148 = vmatpush.msra.mxu0 0.0
    %149 = vmatpush.msra.mxu0 0.0
    %150 = vmatpush.msra.mxu0 0.0
    %151 = vmatpush.msra.mxu0 0.0
    %152 = vmatpush.msra.mxu0 0.0
    %153 = vmatpush.msra.mxu0 0.0
    %154 = vmatpush.msra.mxu0 0.0
    %155 = vmatpush.msra.mxu0 0.0
    %156 = vmatpush.msra.mxu0 %v132
    %157 = vmatpush.msra.mxu0 %v131
    %158 = vmatpush.msra.mxu0 %v130
    %159 = vmatpush.msra.mxu0 %v129
    %160 = vmatmul.f32.gmra.mxu0 %v139
    %v161 = vpop.f32.mrf.mxu0
    %v162 = vadd.f32 %v135, %v161
    %163 = vmatmul.f32.gmra.mxu0 %v142
    %v164 = vpop.f32.mrf.mxu0
    %v165 = vadd.f32 %v135, %v164
    %166 = vdwg.mxu0
    %169 = vrot.lane.b32.xlu0 %v162, 120
    %v170 = vpop.permute.xlu0 %169
    %171 = vrot.lane.b32.xlu0 %v165, 120
    %v172 = vpop.permute.xlu0 %171
    %173 = vrot.lane.b32.xlu0 %v162, 112
    %v174 = vpop.permute.xlu0 %173
    %175 = vrot.lane.b32.xlu0 %v165, 112
    %v176 = vpop.permute.xlu0 %175
    %177 = vrot.lane.b32.xlu0 %v162, 104
    %v178 = vpop.permute.xlu0 %177
    %179 = vrot.lane.b32.xlu0 %v165, 104
    %v180 = vpop.permute.xlu0 %179
    %181 = vrot.lane.b32.xlu0 %v162, 96
    %v182 = vpop.permute.xlu0 %181
    %vm183 = vcmask 64512
    %v184 = vsel %vm183, %v162, 0
    %v186 = vsel %vm183, %v182, 0
    %188 = vmatpush.xpose.msra.mxu0 0.0
    %189 = vmatpush.xpose.msra.mxu0 0.0
    %190 = vmatpush.xpose.msra.mxu0 0.0
    %191 = vmatpush.xpose.msra.mxu0 0.0
    %192 = vmatpush.xpose.msra.mxu0 0.0
    %193 = vmatpush.xpose.msra.mxu0 0.0
    %194 = vmatpush.xpose.msra.mxu0 0.0
    %195 = vmatpush.xpose.msra.mxu0 0.0
    %196 = vmatpush.xpose.msra.mxu0 0.0
    %197 = vmatpush.xpose.msra.mxu0 0.0
    %198 = vmatpush.xpose.msra.mxu0 0.0
    %199 = vmatpush.xpose.msra.mxu0 0.0
    %200 = vmatpush.xpose.msra.mxu0 0.0
    %201 = vmatpush.xpose.msra.mxu0 0.0
    %202 = vmatpush.xpose.msra.mxu0 0.0
    %203 = vmatpush.xpose.msra.mxu0 %v186
    %204 = vmatmul.f32.gmra.mxu0 %v184
    %v205 = vpop.f32.mrf.mxu0
    %v206 = vadd.f32 0.0, %v205
    %207 = vdwg.mxu0
    %208 = vrot.lane.b32.xlu0 %v170, 96
    %v209 = vpop.permute.xlu0 %208
    %v210 = vsel %vm183, %v170, 0
    %v212 = vsel %vm183, %v209, 0
    %214 = vmatpush.xpose.msra.mxu0 0.0
    %215 = vmatpush.xpose.msra.mxu0 0.0
    %216 = vmatpush.xpose.msra.mxu0 0.0
    %217 = vmatpush.xpose.msra.mxu0 0.0
    %218 = vmatpush.xpose.msra.mxu0 0.0
    %219 = vmatpush.xpose.msra.mxu0 0.0
    %220 = vmatpush.xpose.msra.mxu0 0.0
    %221 = vmatpush.xpose.msra.mxu0 0.0
    %222 = vmatpush.xpose.msra.mxu0 0.0
    %223 = vmatpush.xpose.msra.mxu0 0.0
    %224 = vmatpush.xpose.msra.mxu0 0.0
    %225 = vmatpush.xpose.msra.mxu0 0.0
    %226 = vmatpush.xpose.msra.mxu0 0.0
    %227 = vmatpush.xpose.msra.mxu0 0.0
    %228 = vmatpush.xpose.msra.mxu0 0.0
    %229 = vmatpush.xpose.msra.mxu0 %v212
    %230 = vmatmul.f32.gmra.mxu0 %v210
    %v231 = vpop.f32.mrf.mxu0
    %v232 = vadd.f32 0.0, %v231
    %233 = vdwg.mxu0
    %234 = vrot.lane.b32.xlu0 %v174, 96
    %v235 = vpop.permute.xlu0 %234
    %v236 = vsel %vm183, %v174, 0
    %v238 = vsel %vm183, %v235, 0
    %240 = vmatpush.xpose.msra.mxu0 0.0
    %241 = vmatpush.xpose.msra.mxu0 0.0
    %242 = vmatpush.xpose.msra.mxu0 0.0
    %243 = vmatpush.xpose.msra.mxu0 0.0
    %244 = vmatpush.xpose.msra.mxu0 0.0
    %245 = vmatpush.xpose.msra.mxu0 0.0
    %246 = vmatpush.xpose.msra.mxu0 0.0
    %247 = vmatpush.xpose.msra.mxu0 0.0
    %248 = vmatpush.xpose.msra.mxu0 0.0
    %249 = vmatpush.xpose.msra.mxu0 0.0
    %250 = vmatpush.xpose.msra.mxu0 0.0
    %251 = vmatpush.xpose.msra.mxu0 0.0
    %252 = vmatpush.xpose.msra.mxu0 0.0
    %253 = vmatpush.xpose.msra.mxu0 0.0
    %254 = vmatpush.xpose.msra.mxu0 0.0
    %255 = vmatpush.xpose.msra.mxu0 %v238
    %256 = vmatmul.f32.gmra.mxu0 %v236
    %v257 = vpop.f32.mrf.mxu0
    %v258 = vadd.f32 0.0, %v257
    %259 = vdwg.mxu0
    %260 = vrot.lane.b32.xlu0 %v178, 96
    %v261 = vpop.permute.xlu0 %260
    %v262 = vsel %vm183, %v178, 0
    %v264 = vsel %vm183, %v261, 0
    %266 = vmatpush.xpose.msra.mxu0 0.0
    %267 = vmatpush.xpose.msra.mxu0 0.0
    %268 = vmatpush.xpose.msra.mxu0 0.0
    %269 = vmatpush.xpose.msra.mxu0 0.0
    %270 = vmatpush.xpose.msra.mxu0 0.0
    %271 = vmatpush.xpose.msra.mxu0 0.0
    %272 = vmatpush.xpose.msra.mxu0 0.0
    %273 = vmatpush.xpose.msra.mxu0 0.0
    %274 = vmatpush.xpose.msra.mxu0 0.0
    %275 = vmatpush.xpose.msra.mxu0 0.0
    %276 = vmatpush.xpose.msra.mxu0 0.0
    %277 = vmatpush.xpose.msra.mxu0 0.0
    %278 = vmatpush.xpose.msra.mxu0 0.0
    %279 = vmatpush.xpose.msra.mxu0 0.0
    %280 = vmatpush.xpose.msra.mxu0 0.0
    %281 = vmatpush.xpose.msra.mxu0 %v264
    %282 = vmatmul.f32.gmra.mxu0 %v262
    %v283 = vpop.f32.mrf.mxu0
    %v284 = vadd.f32 0.0, %v283
    %285 = vdwg.mxu0
    %286 = vrot.lane.b32.xlu0 %v165, 96
    %v287 = vpop.permute.xlu0 %286
    %v288 = vsel %vm183, %v165, 0
    %v290 = vsel %vm183, %v287, 0
    %292 = vmatpush.xpose.msra.mxu0 0.0
    %293 = vmatpush.xpose.msra.mxu0 0.0
    %294 = vmatpush.xpose.msra.mxu0 0.0
    %295 = vmatpush.xpose.msra.mxu0 0.0
    %296 = vmatpush.xpose.msra.mxu0 0.0
    %297 = vmatpush.xpose.msra.mxu0 0.0
    %298 = vmatpush.xpose.msra.mxu0 0.0
    %299 = vmatpush.xpose.msra.mxu0 0.0
    %300 = vmatpush.xpose.msra.mxu0 0.0
    %301 = vmatpush.xpose.msra.mxu0 0.0
    %302 = vmatpush.xpose.msra.mxu0 0.0
    %303 = vmatpush.xpose.msra.mxu0 0.0
    %304 = vmatpush.xpose.msra.mxu0 0.0
    %305 = vmatpush.xpose.msra.mxu0 0.0
    %306 = vmatpush.xpose.msra.mxu0 0.0
    %307 = vmatpush.xpose.msra.mxu0 %v290
    %308 = vmatmul.f32.gmra.mxu0 %v288
    %v309 = vpop.f32.mrf.mxu0
    %v310 = vadd.f32 0.0, %v309
    %311 = vdwg.mxu0
    %312 = vrot.lane.b32.xlu0 %v172, 96
    %v313 = vpop.permute.xlu0 %312
    %v314 = vsel %vm183, %v172, 0
    %v316 = vsel %vm183, %v313, 0
    %318 = vmatpush.xpose.msra.mxu0 0.0
    %319 = vmatpush.xpose.msra.mxu0 0.0
    %320 = vmatpush.xpose.msra.mxu0 0.0
    %321 = vmatpush.xpose.msra.mxu0 0.0
    %322 = vmatpush.xpose.msra.mxu0 0.0
    %323 = vmatpush.xpose.msra.mxu0 0.0
    %324 = vmatpush.xpose.msra.mxu0 0.0
    %325 = vmatpush.xpose.msra.mxu0 0.0
    %326 = vmatpush.xpose.msra.mxu0 0.0
    %327 = vmatpush.xpose.msra.mxu0 0.0
    %328 = vmatpush.xpose.msra.mxu0 0.0
    %329 = vmatpush.xpose.msra.mxu0 0.0
    %330 = vmatpush.xpose.msra.mxu0 0.0
    %331 = vmatpush.xpose.msra.mxu0 0.0
    %332 = vmatpush.xpose.msra.mxu0 0.0
    %333 = vmatpush.xpose.msra.mxu0 %v316
    %334 = vmatmul.f32.gmra.mxu0 %v314
    %v335 = vpop.f32.mrf.mxu0
    %v336 = vadd.f32 0.0, %v335
    %337 = vdwg.mxu0
    %338 = vrot.lane.b32.xlu0 %v176, 96
    %v339 = vpop.permute.xlu0 %338
    %v340 = vsel %vm183, %v176, 0
    %v342 = vsel %vm183, %v339, 0
    %344 = vmatpush.xpose.msra.mxu0 0.0
    %345 = vmatpush.xpose.msra.mxu0 0.0
    %346 = vmatpush.xpose.msra.mxu0 0.0
    %347 = vmatpush.xpose.msra.mxu0 0.0
    %348 = vmatpush.xpose.msra.mxu0 0.0
    %349 = vmatpush.xpose.msra.mxu0 0.0
    %350 = vmatpush.xpose.msra.mxu0 0.0
    %351 = vmatpush.xpose.msra.mxu0 0.0
    %352 = vmatpush.xpose.msra.mxu0 0.0
    %353 = vmatpush.xpose.msra.mxu0 0.0
    %354 = vmatpush.xpose.msra.mxu0 0.0
    %355 = vmatpush.xpose.msra.mxu0 0.0
    %356 = vmatpush.xpose.msra.mxu0 0.0
    %357 = vmatpush.xpose.msra.mxu0 0.0
    %358 = vmatpush.xpose.msra.mxu0 0.0
    %359 = vmatpush.xpose.msra.mxu0 %v342
    %360 = vmatmul.f32.gmra.mxu0 %v340
    %v361 = vpop.f32.mrf.mxu0
    %v362 = vadd.f32 0.0, %v361
    %363 = vdwg.mxu0
    %364 = vrot.lane.b32.xlu0 %v180, 96
    %v365 = vpop.permute.xlu0 %364
    %v366 = vsel %vm183, %v180, 0
    %v368 = vsel %vm183, %v365, 0
    %370 = vmatpush.xpose.msra.mxu0 0.0
    %371 = vmatpush.xpose.msra.mxu0 0.0
    %372 = vmatpush.xpose.msra.mxu0 0.0
    %373 = vmatpush.xpose.msra.mxu0 0.0
    %374 = vmatpush.xpose.msra.mxu0 0.0
    %375 = vmatpush.xpose.msra.mxu0 0.0
    %376 = vmatpush.xpose.msra.mxu0 0.0
    %377 = vmatpush.xpose.msra.mxu0 0.0
    %378 = vmatpush.xpose.msra.mxu0 0.0
    %379 = vmatpush.xpose.msra.mxu0 0.0
    %380 = vmatpush.xpose.msra.mxu0 0.0
    %381 = vmatpush.xpose.msra.mxu0 0.0
    %382 = vmatpush.xpose.msra.mxu0 0.0
    %383 = vmatpush.xpose.msra.mxu0 0.0
    %384 = vmatpush.xpose.msra.mxu0 0.0
    %385 = vmatpush.xpose.msra.mxu0 %v368
    %386 = vmatmul.f32.gmra.mxu0 %v366
    %v387 = vpop.f32.mrf.mxu0
    %v388 = vadd.f32 0.0, %v387
    %389 = vdwg.mxu0
    %v390 = vsel %vm183, %v206, -inf
    %391 = vmax.xlane.f32.xlu0 %v390
    %v392 = vpop.xlane.xlu0 %391
    %v393 = vsel %vm183, %v232, -inf
    %394 = vmax.xlane.f32.xlu0 %v393
    %v395 = vpop.xlane.xlu0 %394
    %v396 = vsel %vm183, %v258, -inf
    %397 = vmax.xlane.f32.xlu0 %v396
    %v398 = vpop.xlane.xlu0 %397
    %v399 = vsel %vm183, %v284, -inf
    %400 = vmax.xlane.f32.xlu0 %v399
    %v401 = vpop.xlane.xlu0 %400
    %v402 = vsel %vm183, %v310, -inf
    %403 = vmax.xlane.f32.xlu0 %v402
    %v404 = vpop.xlane.xlu0 %403
    %v405 = vsel %vm183, %v336, -inf
    %406 = vmax.xlane.f32.xlu0 %v405
    %v407 = vpop.xlane.xlu0 %406
    %v408 = vsel %vm183, %v362, -inf
    %409 = vmax.xlane.f32.xlu0 %v408
    %v410 = vpop.xlane.xlu0 %409
    %v411 = vsel %vm183, %v388, -inf
    %412 = vmax.xlane.f32.xlu0 %v411
    %v413 = vpop.xlane.xlu0 %412
    %v414 = vsub.f32 %v206, %v392
    %v415 = vsub.f32 %v232, %v395
    %v416 = vsub.f32 %v258, %v398
    %v417 = vsub.f32 %v284, %v401
    %v418 = vsub.f32 %v310, %v404
    %v419 = vsub.f32 %v336, %v407
    %v420 = vsub.f32 %v362, %v410
    %v421 = vsub.f32 %v388, %v413
    %v422 = vmul.f32 %v414, 1.442695
    %v423 = vpow.pop %v422
    %v424 = vmul.f32 %v415, 1.442695
    %v425 = vpow.pop %v424
    %v426 = vmul.f32 %v416, 1.442695
    %v427 = vpow.pop %v426
    %v428 = vmul.f32 %v417, 1.442695
    %v429 = vpow.pop %v428
    %v430 = vmul.f32 %v418, 1.442695
    %v431 = vpow.pop %v430
    %v432 = vmul.f32 %v419, 1.442695
    %v433 = vpow.pop %v432
    %v434 = vmul.f32 %v420, 1.442695
    %v435 = vpow.pop %v434
    %v436 = vmul.f32 %v421, 1.442695
    %v437 = vpow.pop %v436
    %v438 = vsel %vm183, %v423, 0.0
    %439 = vadd.xlane.f32.xlu0 %v438
    %v440 = vpop.xlane.xlu0 %439
    %v441 = vsel %vm183, %v425, 0.0
    %442 = vadd.xlane.f32.xlu0 %v441
    %v443 = vpop.xlane.xlu0 %442
    %v444 = vsel %vm183, %v427, 0.0
    %445 = vadd.xlane.f32.xlu0 %v444
    %v446 = vpop.xlane.xlu0 %445
    %v447 = vsel %vm183, %v429, 0.0
    %448 = vadd.xlane.f32.xlu0 %v447
    %v449 = vpop.xlane.xlu0 %448
    %v450 = vsel %vm183, %v431, 0.0
    %451 = vadd.xlane.f32.xlu0 %v450
    %v452 = vpop.xlane.xlu0 %451
    %v453 = vsel %vm183, %v433, 0.0
    %454 = vadd.xlane.f32.xlu0 %v453
    %v455 = vpop.xlane.xlu0 %454
    %v456 = vsel %vm183, %v435, 0.0
    %457 = vadd.xlane.f32.xlu0 %v456
    %v458 = vpop.xlane.xlu0 %457
    %v459 = vsel %vm183, %v437, 0.0
    %460 = vadd.xlane.f32.xlu0 %v459
    %v461 = vpop.xlane.xlu0 %460
    %v462 = vrcp.pop %v440
    %v463 = vrcp.pop %v443
    %v464 = vrcp.pop %v446
    %v465 = vrcp.pop %v449
    %v466 = vrcp.pop %v452
    %v467 = vrcp.pop %v455
    %v468 = vrcp.pop %v458
    %v469 = vrcp.pop %v461
    %v470 = vmul.f32 %v423, %v462
    %v471 = vmul.f32 %v425, %v463
    %v472 = vmul.f32 %v427, %v464
    %v473 = vmul.f32 %v429, %v465
    %v474 = vmul.f32 %v431, %v466
    %v475 = vmul.f32 %v433, %v467
    %v476 = vmul.f32 %v435, %v468
    %v477 = vmul.f32 %v437, %v469
    %478 = vrot.lane.b32.xlu0 %v162, 64
    %v479 = vpop.permute.xlu0 %478
    %v482 = vsel %vm183, %v470, 0
    %484 = vmatpush.msra.mxu0 0.0
    %485 = vmatpush.msra.mxu0 0.0
    %486 = vmatpush.msra.mxu0 0.0
    %487 = vmatpush.msra.mxu0 0.0
    %488 = vmatpush.msra.mxu0 0.0
    %489 = vmatpush.msra.mxu0 0.0
    %490 = vmatpush.msra.mxu0 0.0
    %491 = vmatpush.msra.mxu0 0.0
    %492 = vmatpush.msra.mxu0 0.0
    %493 = vmatpush.msra.mxu0 0.0
    %494 = vmatpush.msra.mxu0 0.0
    %495 = vmatpush.msra.mxu0 0.0
    %496 = vmatpush.msra.mxu0 0.0
    %497 = vmatpush.msra.mxu0 0.0
    %498 = vmatpush.msra.mxu0 0.0
    %499 = vmatpush.msra.mxu0 %v479
    %500 = vmatmul.f32.gmra.mxu0 %v482
    %v501 = vpop.f32.mrf.mxu0
    %v502 = vadd.f32 0.0, %v501
    %503 = vdwg.mxu0
    %504 = vrot.lane.b32.xlu0 %v170, 64
    %v505 = vpop.permute.xlu0 %504
    %v508 = vsel %vm183, %v471, 0
    %510 = vmatpush.msra.mxu0 0.0
    %511 = vmatpush.msra.mxu0 0.0
    %512 = vmatpush.msra.mxu0 0.0
    %513 = vmatpush.msra.mxu0 0.0
    %514 = vmatpush.msra.mxu0 0.0
    %515 = vmatpush.msra.mxu0 0.0
    %516 = vmatpush.msra.mxu0 0.0
    %517 = vmatpush.msra.mxu0 0.0
    %518 = vmatpush.msra.mxu0 0.0
    %519 = vmatpush.msra.mxu0 0.0
    %520 = vmatpush.msra.mxu0 0.0
    %521 = vmatpush.msra.mxu0 0.0
    %522 = vmatpush.msra.mxu0 0.0
    %523 = vmatpush.msra.mxu0 0.0
    %524 = vmatpush.msra.mxu0 0.0
    %525 = vmatpush.msra.mxu0 %v505
    %526 = vmatmul.f32.gmra.mxu0 %v508
    %v527 = vpop.f32.mrf.mxu0
    %v528 = vadd.f32 0.0, %v527
    %529 = vdwg.mxu0
    %530 = vrot.lane.b32.xlu0 %v174, 64
    %v531 = vpop.permute.xlu0 %530
    %v534 = vsel %vm183, %v472, 0
    %536 = vmatpush.msra.mxu0 0.0
    %537 = vmatpush.msra.mxu0 0.0
    %538 = vmatpush.msra.mxu0 0.0
    %539 = vmatpush.msra.mxu0 0.0
    %540 = vmatpush.msra.mxu0 0.0
    %541 = vmatpush.msra.mxu0 0.0
    %542 = vmatpush.msra.mxu0 0.0
    %543 = vmatpush.msra.mxu0 0.0
    %544 = vmatpush.msra.mxu0 0.0
    %545 = vmatpush.msra.mxu0 0.0
    %546 = vmatpush.msra.mxu0 0.0
    %547 = vmatpush.msra.mxu0 0.0
    %548 = vmatpush.msra.mxu0 0.0
    %549 = vmatpush.msra.mxu0 0.0
    %550 = vmatpush.msra.mxu0 0.0
    %551 = vmatpush.msra.mxu0 %v531
    %552 = vmatmul.f32.gmra.mxu0 %v534
    %v553 = vpop.f32.mrf.mxu0
    %v554 = vadd.f32 0.0, %v553
    %555 = vdwg.mxu0
    %556 = vrot.lane.b32.xlu0 %v178, 64
    %v557 = vpop.permute.xlu0 %556
    %v560 = vsel %vm183, %v473, 0
    %562 = vmatpush.msra.mxu0 0.0
    %563 = vmatpush.msra.mxu0 0.0
    %564 = vmatpush.msra.mxu0 0.0
    %565 = vmatpush.msra.mxu0 0.0
    %566 = vmatpush.msra.mxu0 0.0
    %567 = vmatpush.msra.mxu0 0.0
    %568 = vmatpush.msra.mxu0 0.0
    %569 = vmatpush.msra.mxu0 0.0
    %570 = vmatpush.msra.mxu0 0.0
    %571 = vmatpush.msra.mxu0 0.0
    %572 = vmatpush.msra.mxu0 0.0
    %573 = vmatpush.msra.mxu0 0.0
    %574 = vmatpush.msra.mxu0 0.0
    %575 = vmatpush.msra.mxu0 0.0
    %576 = vmatpush.msra.mxu0 0.0
    %577 = vmatpush.msra.mxu0 %v557
    %578 = vmatmul.f32.gmra.mxu0 %v560
    %v579 = vpop.f32.mrf.mxu0
    %v580 = vadd.f32 0.0, %v579
    %581 = vdwg.mxu0
    %582 = vrot.lane.b32.xlu0 %v165, 64
    %v583 = vpop.permute.xlu0 %582
    %v586 = vsel %vm183, %v474, 0
    %588 = vmatpush.msra.mxu0 0.0
    %589 = vmatpush.msra.mxu0 0.0
    %590 = vmatpush.msra.mxu0 0.0
    %591 = vmatpush.msra.mxu0 0.0
    %592 = vmatpush.msra.mxu0 0.0
    %593 = vmatpush.msra.mxu0 0.0
    %594 = vmatpush.msra.mxu0 0.0
    %595 = vmatpush.msra.mxu0 0.0
    %596 = vmatpush.msra.mxu0 0.0
    %597 = vmatpush.msra.mxu0 0.0
    %598 = vmatpush.msra.mxu0 0.0
    %599 = vmatpush.msra.mxu0 0.0
    %600 = vmatpush.msra.mxu0 0.0
    %601 = vmatpush.msra.mxu0 0.0
    %602 = vmatpush.msra.mxu0 0.0
    %603 = vmatpush.msra.mxu0 %v583
    %604 = vmatmul.f32.gmra.mxu0 %v586
    %v605 = vpop.f32.mrf.mxu0
    %v606 = vadd.f32 0.0, %v605
    %607 = vdwg.mxu0
    %608 = vrot.lane.b32.xlu0 %v172, 64
    %v609 = vpop.permute.xlu0 %608
    %v612 = vsel %vm183, %v475, 0
    %614 = vmatpush.msra.mxu0 0.0
    %615 = vmatpush.msra.mxu0 0.0
    %616 = vmatpush.msra.mxu0 0.0
    %617 = vmatpush.msra.mxu0 0.0
    %618 = vmatpush.msra.mxu0 0.0
    %619 = vmatpush.msra.mxu0 0.0
    %620 = vmatpush.msra.mxu0 0.0
    %621 = vmatpush.msra.mxu0 0.0
    %622 = vmatpush.msra.mxu0 0.0
    %623 = vmatpush.msra.mxu0 0.0
    %624 = vmatpush.msra.mxu0 0.0
    %625 = vmatpush.msra.mxu0 0.0
    %626 = vmatpush.msra.mxu0 0.0
    %627 = vmatpush.msra.mxu0 0.0
    %628 = vmatpush.msra.mxu0 0.0
    %629 = vmatpush.msra.mxu0 %v609
    %630 = vmatmul.f32.gmra.mxu0 %v612
    %v631 = vpop.f32.mrf.mxu0
    %v632 = vadd.f32 0.0, %v631
    %633 = vdwg.mxu0
    %634 = vrot.lane.b32.xlu0 %v176, 64
    %v635 = vpop.permute.xlu0 %634
    %v638 = vsel %vm183, %v476, 0
    %640 = vmatpush.msra.mxu0 0.0
    %641 = vmatpush.msra.mxu0 0.0
    %642 = vmatpush.msra.mxu0 0.0
    %643 = vmatpush.msra.mxu0 0.0
    %644 = vmatpush.msra.mxu0 0.0
    %645 = vmatpush.msra.mxu0 0.0
    %646 = vmatpush.msra.mxu0 0.0
    %647 = vmatpush.msra.mxu0 0.0
    %648 = vmatpush.msra.mxu0 0.0
    %649 = vmatpush.msra.mxu0 0.0
    %650 = vmatpush.msra.mxu0 0.0
    %651 = vmatpush.msra.mxu0 0.0
    %652 = vmatpush.msra.mxu0 0.0
    %653 = vmatpush.msra.mxu0 0.0
    %654 = vmatpush.msra.mxu0 0.0
    %655 = vmatpush.msra.mxu0 %v635
    %656 = vmatmul.f32.gmra.mxu0 %v638
    %v657 = vpop.f32.mrf.mxu0
    %v658 = vadd.f32 0.0, %v657
    %659 = vdwg.mxu0
    %660 = vrot.lane.b32.xlu0 %v180, 64
    %v661 = vpop.permute.xlu0 %660
    %v664 = vsel %vm183, %v477, 0
    %666 = vmatpush.msra.mxu0 0.0
    %667 = vmatpush.msra.mxu0 0.0
    %668 = vmatpush.msra.mxu0 0.0
    %669 = vmatpush.msra.mxu0 0.0
    %670 = vmatpush.msra.mxu0 0.0
    %671 = vmatpush.msra.mxu0 0.0
    %672 = vmatpush.msra.mxu0 0.0
    %673 = vmatpush.msra.mxu0 0.0
    %674 = vmatpush.msra.mxu0 0.0
    %675 = vmatpush.msra.mxu0 0.0
    %676 = vmatpush.msra.mxu0 0.0
    %677 = vmatpush.msra.mxu0 0.0
    %678 = vmatpush.msra.mxu0 0.0
    %679 = vmatpush.msra.mxu0 0.0
    %680 = vmatpush.msra.mxu0 0.0
    %681 = vmatpush.msra.mxu0 %v661
    %682 = vmatmul.f32.gmra.mxu0 %v664
    %v683 = vpop.f32.mrf.mxu0
    %v684 = vadd.f32 0.0, %v683
    %685 = vdwg.mxu0
    %v686 = vld [vmem:[%s4] sm:$0xff]
    %v687 = vld [vmem:[%s4 + $0x8] sm:$0xff]
    %v688 = vld [vmem:[%s4 + $0x10] sm:$0xff]
    %v689 = vld [vmem:[%s4 + $0x18] sm:$0xff]
    %v691 = vsel %vm183, %v502, 0
    %693 = vmatpush.msra.mxu0 0.0
    %694 = vmatpush.msra.mxu0 0.0
    %695 = vmatpush.msra.mxu0 0.0
    %696 = vmatpush.msra.mxu0 0.0
    %697 = vmatpush.msra.mxu0 0.0
    %698 = vmatpush.msra.mxu0 0.0
    %699 = vmatpush.msra.mxu0 0.0
    %700 = vmatpush.msra.mxu0 0.0
    %701 = vmatpush.msra.mxu0 0.0
    %702 = vmatpush.msra.mxu0 0.0
    %703 = vmatpush.msra.mxu0 0.0
    %704 = vmatpush.msra.mxu0 0.0
    %705 = vmatpush.msra.mxu0 0.0
    %706 = vmatpush.msra.mxu0 0.0
    %707 = vmatpush.msra.mxu0 0.0
    %708 = vmatpush.msra.mxu0 %v686
    %709 = vmatmul.f32.gmra.mxu0 %v691
    %v710 = vpop.f32.mrf.mxu0
    %v711 = vadd.f32 0.0, %v710
    %712 = vdwg.mxu0
    %v714 = vsel %vm183, %v528, 0
    %716 = vmatpush.msra.mxu0 0.0
    %717 = vmatpush.msra.mxu0 0.0
    %718 = vmatpush.msra.mxu0 0.0
    %719 = vmatpush.msra.mxu0 0.0
    %720 = vmatpush.msra.mxu0 0.0
    %721 = vmatpush.msra.mxu0 0.0
    %722 = vmatpush.msra.mxu0 0.0
    %723 = vmatpush.msra.mxu0 0.0
    %724 = vmatpush.msra.mxu0 0.0
    %725 = vmatpush.msra.mxu0 0.0
    %726 = vmatpush.msra.mxu0 0.0
    %727 = vmatpush.msra.mxu0 0.0
    %728 = vmatpush.msra.mxu0 0.0
    %729 = vmatpush.msra.mxu0 0.0
    %730 = vmatpush.msra.mxu0 0.0
    %731 = vmatpush.msra.mxu0 %v687
    %732 = vmatmul.f32.gmra.mxu0 %v714
    %v733 = vpop.f32.mrf.mxu0
    %v734 = vadd.f32 0.0, %v733
    %735 = vdwg.mxu0
    %v737 = vsel %vm183, %v554, 0
    %739 = vmatpush.msra.mxu0 0.0
    %740 = vmatpush.msra.mxu0 0.0
    %741 = vmatpush.msra.mxu0 0.0
    %742 = vmatpush.msra.mxu0 0.0
    %743 = vmatpush.msra.mxu0 0.0
    %744 = vmatpush.msra.mxu0 0.0
    %745 = vmatpush.msra.mxu0 0.0
    %746 = vmatpush.msra.mxu0 0.0
    %747 = vmatpush.msra.mxu0 0.0
    %748 = vmatpush.msra.mxu0 0.0
    %749 = vmatpush.msra.mxu0 0.0
    %750 = vmatpush.msra.mxu0 0.0
    %751 = vmatpush.msra.mxu0 0.0
    %752 = vmatpush.msra.mxu0 0.0
    %753 = vmatpush.msra.mxu0 0.0
    %754 = vmatpush.msra.mxu0 %v688
    %755 = vmatmul.f32.gmra.mxu0 %v737
    %v756 = vpop.f32.mrf.mxu0
    %v757 = vadd.f32 0.0, %v756
    %758 = vdwg.mxu0
    %v760 = vsel %vm183, %v580, 0
    %762 = vmatpush.msra.mxu0 0.0
    %763 = vmatpush.msra.mxu0 0.0
    %764 = vmatpush.msra.mxu0 0.0
    %765 = vmatpush.msra.mxu0 0.0
    %766 = vmatpush.msra.mxu0 0.0
    %767 = vmatpush.msra.mxu0 0.0
    %768 = vmatpush.msra.mxu0 0.0
    %769 = vmatpush.msra.mxu0 0.0
    %770 = vmatpush.msra.mxu0 0.0
    %771 = vmatpush.msra.mxu0 0.0
    %772 = vmatpush.msra.mxu0 0.0
    %773 = vmatpush.msra.mxu0 0.0
    %774 = vmatpush.msra.mxu0 0.0
    %775 = vmatpush.msra.mxu0 0.0
    %776 = vmatpush.msra.mxu0 0.0
    %777 = vmatpush.msra.mxu0 %v689
    %778 = vmatmul.f32.gmra.mxu0 %v760
    %v779 = vpop.f32.mrf.mxu0
    %v780 = vadd.f32 0.0, %v779
    %781 = vdwg.mxu0
    %v783 = vsel %vm183, %v606, 0
    %785 = vmatpush.msra.mxu0 0.0
    %786 = vmatpush.msra.mxu0 0.0
    %787 = vmatpush.msra.mxu0 0.0
    %788 = vmatpush.msra.mxu0 0.0
    %789 = vmatpush.msra.mxu0 0.0
    %790 = vmatpush.msra.mxu0 0.0
    %791 = vmatpush.msra.mxu0 0.0
    %792 = vmatpush.msra.mxu0 0.0
    %793 = vmatpush.msra.mxu0 0.0
    %794 = vmatpush.msra.mxu0 0.0
    %795 = vmatpush.msra.mxu0 0.0
    %796 = vmatpush.msra.mxu0 0.0
    %797 = vmatpush.msra.mxu0 0.0
    %798 = vmatpush.msra.mxu0 0.0
    %799 = vmatpush.msra.mxu0 0.0
    %800 = vmatpush.msra.mxu0 %v686
    %801 = vmatmul.f32.gmra.mxu0 %v783
    %v802 = vpop.f32.mrf.mxu0
    %v803 = vadd.f32 0.0, %v802
    %804 = vdwg.mxu0
    %v806 = vsel %vm183, %v632, 0
    %808 = vmatpush.msra.mxu0 0.0
    %809 = vmatpush.msra.mxu0 0.0
    %810 = vmatpush.msra.mxu0 0.0
    %811 = vmatpush.msra.mxu0 0.0
    %812 = vmatpush.msra.mxu0 0.0
    %813 = vmatpush.msra.mxu0 0.0
    %814 = vmatpush.msra.mxu0 0.0
    %815 = vmatpush.msra.mxu0 0.0
    %816 = vmatpush.msra.mxu0 0.0
    %817 = vmatpush.msra.mxu0 0.0
    %818 = vmatpush.msra.mxu0 0.0
    %819 = vmatpush.msra.mxu0 0.0
    %820 = vmatpush.msra.mxu0 0.0
    %821 = vmatpush.msra.mxu0 0.0
    %822 = vmatpush.msra.mxu0 0.0
    %823 = vmatpush.msra.mxu0 %v687
    %824 = vmatmul.f32.gmra.mxu0 %v806
    %v825 = vpop.f32.mrf.mxu0
    %v826 = vadd.f32 0.0, %v825
    %827 = vdwg.mxu0
    %v829 = vsel %vm183, %v658, 0
    %831 = vmatpush.msra.mxu0 0.0
    %832 = vmatpush.msra.mxu0 0.0
    %833 = vmatpush.msra.mxu0 0.0
    %834 = vmatpush.msra.mxu0 0.0
    %835 = vmatpush.msra.mxu0 0.0
    %836 = vmatpush.msra.mxu0 0.0
    %837 = vmatpush.msra.mxu0 0.0
    %838 = vmatpush.msra.mxu0 0.0
    %839 = vmatpush.msra.mxu0 0.0
    %840 = vmatpush.msra.mxu0 0.0
    %841 = vmatpush.msra.mxu0 0.0
    %842 = vmatpush.msra.mxu0 0.0
    %843 = vmatpush.msra.mxu0 0.0
    %844 = vmatpush.msra.mxu0 0.0
    %845 = vmatpush.msra.mxu0 0.0
    %846 = vmatpush.msra.mxu0 %v688
    %847 = vmatmul.f32.gmra.mxu0 %v829
    %v848 = vpop.f32.mrf.mxu0
    %v849 = vadd.f32 0.0, %v848
    %850 = vdwg.mxu0
    %v852 = vsel %vm183, %v684, 0
    %854 = vmatpush.msra.mxu0 0.0
    %855 = vmatpush.msra.mxu0 0.0
    %856 = vmatpush.msra.mxu0 0.0
    %857 = vmatpush.msra.mxu0 0.0
    %858 = vmatpush.msra.mxu0 0.0
    %859 = vmatpush.msra.mxu0 0.0
    %860 = vmatpush.msra.mxu0 0.0
    %861 = vmatpush.msra.mxu0 0.0
    %862 = vmatpush.msra.mxu0 0.0
    %863 = vmatpush.msra.mxu0 0.0
    %864 = vmatpush.msra.mxu0 0.0
    %865 = vmatpush.msra.mxu0 0.0
    %866 = vmatpush.msra.mxu0 0.0
    %867 = vmatpush.msra.mxu0 0.0
    %868 = vmatpush.msra.mxu0 0.0
    %869 = vmatpush.msra.mxu0 %v689
    %870 = vmatmul.f32.gmra.mxu0 %v852
    %v871 = vpop.f32.mrf.mxu0
    %v872 = vadd.f32 0.0, %v871
    %873 = vdwg.mxu0
    %v874 = vadd.f32 %v711, %v734
    %v875 = vadd.f32 %v803, %v826
    %v876 = vadd.f32 %v874, %v757
    %v877 = vadd.f32 %v875, %v849
    %v878 = vadd.f32 %v876, %v780
    %v879 = vadd.f32 %v877, %v872
    %v880 = vld [vmem:[#allocation7] sm:$0x1]
    %v882 = vperm.slane %v880, 0
    %v884 = vadd.f32 %v878, %v882
    %v885 = vadd.f32 %v879, %v882
    %v886 = vadd.f32 %v127, %v884
    %v887 = vadd.f32 %v128, %v885
    %v888 = vld [vmem:[%s10] sm:$0x1]
    %v889 = vld [vmem:[#allocation8] sm:$0x1]
    %v890 = vsel %vm137, %v886, 0.0
    %891 = vadd.xlane.f32.xlu0 %v890
    %v892 = vpop.xlane.xlu0 %891
    %v893 = vsel %vm137, %v887, 0.0
    %894 = vadd.xlane.f32.xlu0 %v893
    %v895 = vpop.xlane.xlu0 %894
    %v896 = vrcp.pop 32.0
    %v897 = vmul.f32 32.0, %v896
    %v898 = vsub.f32 1.0, %v897
    %v899 = vmul.f32 %v896, %v898
    %v900 = vadd.f32 %v896, %v899
    %vm901 = vweird.f32 %v896
    %v902 = vsel %vm901, %v896, %v900
    %v903 = vmul.f32 %v892, %v902
    %v904 = vmul.f32 %v895, %v902
    %v905 = vsub.f32 %v886, %v903
    %v906 = vsub.f32 %v887, %v904
    %v907 = vmul.f32 %v905, %v905
    %v908 = vmul.f32 %v906, %v906
    %v909 = vsel %vm137, %v907, 0.0
    %910 = vadd.xlane.f32.xlu0 %v909
    %v911 = vpop.xlane.xlu0 %910
    %v912 = vsel %vm137, %v908, 0.0
    %913 = vadd.xlane.f32.xlu0 %v912
    %v914 = vpop.xlane.xlu0 %913
    %v915 = vmul.f32 %v911, %v902
    %v916 = vmul.f32 %v914, %v902
    %v917 = vadd.f32 %v915, 1e-05
    %v918 = vadd.f32 %v916, 1e-05
    %v919 = vrsqrt.pop %v917
    %v920 = vmul.f32 %v919, %v917
    %v921 = vmul.f32 %v920, %v919
    %v922 = vmul.f32 0.5, %v921
    %v923 = vsub.f32 1.5, %v922
    %v924 = vmul.f32 %v919, %v923
    %vm925 = vweird.f32 %v917
    %vm926 = vweird.f32 %v919
    %vm927 = vmor %vm925, %vm926
    %v928 = vsel %vm927, %v919, %v924
    %v929 = vrsqrt.pop %v918
    %v930 = vmul.f32 %v929, %v918
    %v931 = vmul.f32 %v930, %v929
    %v932 = vmul.f32 0.5, %v931
    %v933 = vsub.f32 1.5, %v932
    %v934 = vmul.f32 %v929, %v933
    %vm935 = vweird.f32 %v918
    %vm936 = vweird.f32 %v929
    %vm937 = vmor %vm935, %vm936
    %v938 = vsel %vm937, %v929, %v934
    %v939 = vmul.f32 %v905, %v928
    %v940 = vmul.f32 %v906, %v938
    %v942 = vperm.slane %v888, 0
    %v944 = vmul.f32 %v939, %v942
    %v945 = vmul.f32 %v940, %v942
    %v947 = vperm.slane %v889, 0
    %v949 = vadd.f32 %v944, %v947
    %v950 = vadd.f32 %v945, %v947
    %v951 = vld [vmem:[%s6] sm:$0xff]
    %v952 = vld [vmem:[%s6 + $0x8] sm:$0xff]
    %v953 = vld [vmem:[%s6 + $0x10] sm:$0xff]
    %v954 = vld [vmem:[%s6 + $0x18] sm:$0xff]
    %v955 = vld [vmem:[%s7] sm:$0x1]
    %v957 = vperm.slane %v955, 0
    %v960 = vsel %vm137, %v949, 0
    %v963 = vsel %vm137, %v950, 0
    %965 = vmatpush.msra.mxu0 0.0
    %966 = vmatpush.msra.mxu0 0.0
    %967 = vmatpush.msra.mxu0 0.0
    %968 = vmatpush.msra.mxu0 0.0
    %969 = vmatpush.msra.mxu0 0.0
    %970 = vmatpush.msra.mxu0 0.0
    %971 = vmatpush.msra.mxu0 0.0
    %972 = vmatpush.msra.mxu0 0.0
    %973 = vmatpush.msra.mxu0 0.0
    %974 = vmatpush.msra.mxu0 0.0
    %975 = vmatpush.msra.mxu0 0.0
    %976 = vmatpush.msra.mxu0 0.0
    %977 = vmatpush.msra.mxu0 %v954
    %978 = vmatpush.msra.mxu0 %v953
    %979 = vmatpush.msra.mxu0 %v952
    %980 = vmatpush.msra.mxu0 %v951
    %981 = vmatmul.f32.gmra.mxu0 %v960
    %v982 = vpop.f32.mrf.mxu0
    %v983 = vadd.f32 %v957, %v982
    %984 = vmatmul.f32.gmra.mxu0 %v963
    %v985 = vpop.f32.mrf.mxu0
    %v986 = vadd.f32 %v957, %v985
    %987 = vdwg.mxu0
    %v988 = vmax.f32 %v983, 0.0
    %v989 = vmax.f32 %v986, 0.0
    %v990 = vld [vmem:[%s8] sm:$0xff]
    %v991 = vld [vmem:[%s8 + $0x8] sm:$0xff]
    %v992 = vld [vmem:[%s8 + $0x10] sm:$0xff]
    %v993 = vld [vmem:[%s8 + $0x18] sm:$0xff]
    %v994 = vld [vmem:[%s8 + $0x20] sm:$0xff]
    %v995 = vld [vmem:[%s8 + $0x28] sm:$0xff]
    %v996 = vld [vmem:[%s8 + $0x30] sm:$0xff]
    %v997 = vld [vmem:[%s8 + $0x38] sm:$0xff]
    %v998 = vld [vmem:[%s9] sm:$0x1]
    %v1000 = vperm.slane %v998, 0
    %vm1002 = vcmask 523264
    %v1004 = vsel %vm1002, %v988, 0
    %v1007 = vsel %vm1002, %v989, 0
    %1009 = vmatpush.msra.mxu0 0.0
    %1010 = vmatpush.msra.mxu0 0.0
    %1011 = vmatpush.msra.mxu0 0.0
    %1012 = vmatpush.msra.mxu0 0.0
    %1013 = vmatpush.msra.mxu0 0.0
    %1014 = vmatpush.msra.mxu0 0.0
    %1015 = vmatpush.msra.mxu0 0.0
    %1016 = vmatpush.msra.mxu0 0.0
    %1017 = vmatpush.msra.mxu0 %v997
    %1018 = vmatpush.msra.mxu0 %v996
    %1019 = vmatpush.msra.mxu0 %v995
    %1020 = vmatpush.msra.mxu0 %v994
    %1021 = vmatpush.msra.mxu0 %v993
    %1022 = vmatpush.msra.mxu0 %v992
    %1023 = vmatpush.msra.mxu0 %v991
    %1024 = vmatpush.msra.mxu0 %v990
    %1025 = vmatmul.f32.gmra.mxu0 %v1004
    %v1026 = vpop.f32.mrf.mxu0
    %v1027 = vadd.f32 %v1000, %v1026
    %1028 = vmatmul.f32.gmra.mxu0 %v1007
    %v1029 = vpop.f32.mrf.mxu0
    %v1030 = vadd.f32 %v1000, %v1029
    %1031 = vdwg.mxu0
    %v1032 = vadd.f32 %v949, %v1027
    %v1033 = vadd.f32 %v950, %v1030
    %v1034 = vld [vmem:[%s12] sm:$0x1]
    %v1035 = vld [vmem:[#allocation10] sm:$0x1]
    %v1036 = vsel %vm137, %v1032, 0.0
    %1037 = vadd.xlane.f32.xlu0 %v1036
    %v1038 = vpop.xlane.xlu0 %1037
    %v1039 = vsel %vm137, %v1033, 0.0
    %1040 = vadd.xlane.f32.xlu0 %v1039
    %v1041 = vpop.xlane.xlu0 %1040
    %v1042 = vmul.f32 %v1038, %v902
    %v1043 = vmul.f32 %v1041, %v902
    %v1044 = vsub.f32 %v1032, %v1042
    %v1045 = vsub.f32 %v1033, %v1043
    %v1046 = vmul.f32 %v1044, %v1044
    %v1047 = vmul.f32 %v1045, %v1045
    %v1048 = vsel %vm137, %v1046, 0.0
    %1049 = vadd.xlane.f32.xlu0 %v1048
    %v1050 = vpop.xlane.xlu0 %1049
    %v1051 = vsel %vm137, %v1047, 0.0
    %1052 = vadd.xlane.f32.xlu0 %v1051
    %v1053 = vpop.xlane.xlu0 %1052
    %v1054 = vmul.f32 %v1050, %v902
    %v1055 = vmul.f32 %v1053, %v902
    %v1056 = vadd.f32 %v1054, 1e-05
    %v1057 = vadd.f32 %v1055, 1e-05
    %v1058 = vrsqrt.pop %v1056
    %v1059 = vmul.f32 %v1058, %v1056
    %v1060 = vmul.f32 %v1059, %v1058
    %v1061 = vmul.f32 0.5, %v1060
    %v1062 = vsub.f32 1.5, %v1061
    %v1063 = vmul.f32 %v1058, %v1062
    %vm1064 = vweird.f32 %v1056
    %vm1065 = vweird.f32 %v1058
    %vm1066 = vmor %vm1064, %vm1065
    %v1067 = vsel %vm1066, %v1058, %v1063
    %v1068 = vrsqrt.pop %v1057
    %v1069 = vmul.f32 %v1068, %v1057
    %v1070 = vmul.f32 %v1069, %v1068
    %v1071 = vmul.f32 0.5, %v1070
    %v1072 = vsub.f32 1.5, %v1071
    %v1073 = vmul.f32 %v1068, %v1072
    %vm1074 = vweird.f32 %v1057
    %vm1075 = vweird.f32 %v1068
    %vm1076 = vmor %vm1074, %vm1075
    %v1077 = vsel %vm1076, %v1068, %v1073
    %v1078 = vmul.f32 %v1044, %v1067
    %v1079 = vmul.f32 %v1045, %v1077
    %v1081 = vperm.slane %v1034, 0
    %v1083 = vmul.f32 %v1078, %v1081
    %v1084 = vmul.f32 %v1079, %v1081
    %v1086 = vperm.slane %v1035, 0
    %v1088 = vadd.f32 %v1083, %v1086
    %v1089 = vadd.f32 %v1084, %v1086
    %s1090 = scalar_lea.vmem %s2, 32
    %v1091 = vld [vmem:[%s1090] sm:$0xff]
    %v1092 = vld [vmem:[%s1090 + $0x8] sm:$0xff]
    %v1093 = vld [vmem:[%s1090 + $0x10] sm:$0xff]
    %v1094 = vld [vmem:[%s1090 + $0x18] sm:$0xff]
    %s1095 = scalar_lea.vmem %s3, 1
    %v1096 = vld [vmem:[%s1095] sm:$0x1]
    %v1098 = vperm.slane %v1096, 0
    %v1101 = vsel %vm137, %v1088, 0
    %v1104 = vsel %vm137, %v1089, 0
    %1106 = vmatpush.msra.mxu0 0.0
    %1107 = vmatpush.msra.mxu0 0.0
    %1108 = vmatpush.msra.mxu0 0.0
    %1109 = vmatpush.msra.mxu0 0.0
    %1110 = vmatpush.msra.mxu0 0.0
    %1111 = vmatpush.msra.mxu0 0.0
    %1112 = vmatpush.msra.mxu0 0.0
    %1113 = vmatpush.msra.mxu0 0.0
    %1114 = vmatpush.msra.mxu0 0.0
    %1115 = vmatpush.msra.mxu0 0.0
    %1116 = vmatpush.msra.mxu0 0.0
    %1117 = vmatpush.msra.mxu0 0.0
    %1118 = vmatpush.msra.mxu0 %v1094
    %1119 = vmatpush.msra.mxu0 %v1093
    %1120 = vmatpush.msra.mxu0 %v1092
    %1121 = vmatpush.msra.mxu0 %v1091
    %1122 = vmatmul.f32.gmra.mxu0 %v1101
    %v1123 = vpop.f32.mrf.mxu0
    %v1124 = vadd.f32 %v1098, %v1123
    %1125 = vmatmul.f32.gmra.mxu0 %v1104
    %v1126 = vpop.f32.mrf.mxu0
    %v1127 = vadd.f32 %v1098, %v1126
    %1128 = vdwg.mxu0
    %1131 = vrot.lane.b32.xlu0 %v1124, 120
    %v1132 = vpop.permute.xlu0 %1131
    %1133 = vrot.lane.b32.xlu0 %v1127, 120
    %v1134 = vpop.permute.xlu0 %1133
    %1135 = vrot.lane.b32.xlu0 %v1124, 112
    %v1136 = vpop.permute.xlu0 %1135
    %1137 = vrot.lane.b32.xlu0 %v1127, 112
    %v1138 = vpop.permute.xlu0 %1137
    %1139 = vrot.lane.b32.xlu0 %v1124, 104
    %v1140 = vpop.permute.xlu0 %1139
    %1141 = vrot.lane.b32.xlu0 %v1127, 104
    %v1142 = vpop.permute.xlu0 %1141
    %1143 = vrot.lane.b32.xlu0 %v1124, 96
    %v1144 = vpop.permute.xlu0 %1143
    %v1145 = vsel %vm183, %v1124, 0
    %v1147 = vsel %vm183, %v1144, 0
    %1149 = vmatpush.xpose.msra.mxu0 0.0
    %1150 = vmatpush.xpose.msra.mxu0 0.0
    %1151 = vmatpush.xpose.msra.mxu0 0.0
    %1152 = vmatpush.xpose.msra.mxu0 0.0
    %1153 = vmatpush.xpose.msra.mxu0 0.0
    %1154 = vmatpush.xpose.msra.mxu0 0.0
    %1155 = vmatpush.xpose.msra.mxu0 0.0
    %1156 = vmatpush.xpose.msra.mxu0 0.0
    %1157 = vmatpush.xpose.msra.mxu0 0.0
    %1158 = vmatpush.xpose.msra.mxu0 0.0
    %1159 = vmatpush.xpose.msra.mxu0 0.0
    %1160 = vmatpush.xpose.msra.mxu0 0.0
    %1161 = vmatpush.xpose.msra.mxu0 0.0
    %1162 = vmatpush.xpose.msra.mxu0 0.0
    %1163 = vmatpush.xpose.msra.mxu0 0.0
    %1164 = vmatpush.xpose.msra.mxu0 %v1147
    %1165 = vmatmul.f32.gmra.mxu0 %v1145
    %v1166 = vpop.f32.mrf.mxu0
    %v1167 = vadd.f32 0.0, %v1166
    %1168 = vdwg.mxu0
    %1169 = vrot.lane.b32.xlu0 %v1132, 96
    %v1170 = vpop.permute.xlu0 %1169
    %v1171 = vsel %vm183, %v1132, 0
    %v1173 = vsel %vm183, %v1170, 0
    %1175 = vmatpush.xpose.msra.mxu0 0.0
    %1176 = vmatpush.xpose.msra.mxu0 0.0
    %1177 = vmatpush.xpose.msra.mxu0 0.0
    %1178 = vmatpush.xpose.msra.mxu0 0.0
    %1179 = vmatpush.xpose.msra.mxu0 0.0
    %1180 = vmatpush.xpose.msra.mxu0 0.0
    %1181 = vmatpush.xpose.msra.mxu0 0.0
    %1182 = vmatpush.xpose.msra.mxu0 0.0
    %1183 = vmatpush.xpose.msra.mxu0 0.0
    %1184 = vmatpush.xpose.msra.mxu0 0.0
    %1185 = vmatpush.xpose.msra.mxu0 0.0
    %1186 = vmatpush.xpose.msra.mxu0 0.0
    %1187 = vmatpush.xpose.msra.mxu0 0.0
    %1188 = vmatpush.xpose.msra.mxu0 0.0
    %1189 = vmatpush.xpose.msra.mxu0 0.0
    %1190 = vmatpush.xpose.msra.mxu0 %v1173
    %1191 = vmatmul.f32.gmra.mxu0 %v1171
    %v1192 = vpop.f32.mrf.mxu0
    %v1193 = vadd.f32 0.0, %v1192
    %1194 = vdwg.mxu0
    %1195 = vrot.lane.b32.xlu0 %v1136, 96
    %v1196 = vpop.permute.xlu0 %1195
    %v1197 = vsel %vm183, %v1136, 0
    %v1199 = vsel %vm183, %v1196, 0
    %1201 = vmatpush.xpose.msra.mxu0 0.0
    %1202 = vmatpush.xpose.msra.mxu0 0.0
    %1203 = vmatpush.xpose.msra.mxu0 0.0
    %1204 = vmatpush.xpose.msra.mxu0 0.0
    %1205 = vmatpush.xpose.msra.mxu0 0.0
    %1206 = vmatpush.xpose.msra.mxu0 0.0
    %1207 = vmatpush.xpose.msra.mxu0 0.0
    %1208 = vmatpush.xpose.msra.mxu0 0.0
    %1209 = vmatpush.xpose.msra.mxu0 0.0
    %1210 = vmatpush.xpose.msra.mxu0 0.0
    %1211 = vmatpush.xpose.msra.mxu0 0.0
    %1212 = vmatpush.xpose.msra.mxu0 0.0
    %1213 = vmatpush.xpose.msra.mxu0 0.0
    %1214 = vmatpush.xpose.msra.mxu0 0.0
    %1215 = vmatpush.xpose.msra.mxu0 0.0
    %1216 = vmatpush.xpose.msra.mxu0 %v1199
    %1217 = vmatmul.f32.gmra.mxu0 %v1197
    %v1218 = vpop.f32.mrf.mxu0
    %v1219 = vadd.f32 0.0, %v1218
    %1220 = vdwg.mxu0
    %1221 = vrot.lane.b32.xlu0 %v1140, 96
    %v1222 = vpop.permute.xlu0 %1221
    %v1223 = vsel %vm183, %v1140, 0
    %v1225 = vsel %vm183, %v1222, 0
    %1227 = vmatpush.xpose.msra.mxu0 0.0
    %1228 = vmatpush.xpose.msra.mxu0 0.0
    %1229 = vmatpush.xpose.msra.mxu0 0.0
    %1230 = vmatpush.xpose.msra.mxu0 0.0
    %1231 = vmatpush.xpose.msra.mxu0 0.0
    %1232 = vmatpush.xpose.msra.mxu0 0.0
    %1233 = vmatpush.xpose.msra.mxu0 0.0
    %1234 = vmatpush.xpose.msra.mxu0 0.0
    %1235 = vmatpush.xpose.msra.mxu0 0.0
    %1236 = vmatpush.xpose.msra.mxu0 0.0
    %1237 = vmatpush.xpose.msra.mxu0 0.0
    %1238 = vmatpush.xpose.msra.mxu0 0.0
    %1239 = vmatpush.xpose.msra.mxu0 0.0
    %1240 = vmatpush.xpose.msra.mxu0 0.0
    %1241 = vmatpush.xpose.msra.mxu0 0.0
    %1242 = vmatpush.xpose.msra.mxu0 %v1225
    %1243 = vmatmul.f32.gmra.mxu0 %v1223
    %v1244 = vpop.f32.mrf.mxu0
    %v1245 = vadd.f32 0.0, %v1244
    %1246 = vdwg.mxu0
    %1247 = vrot.lane.b32.xlu0 %v1127, 96
    %v1248 = vpop.permute.xlu0 %1247
    %v1249 = vsel %vm183, %v1127, 0
    %v1251 = vsel %vm183, %v1248, 0
    %1253 = vmatpush.xpose.msra.mxu0 0.0
    %1254 = vmatpush.xpose.msra.mxu0 0.0
    %1255 = vmatpush.xpose.msra.mxu0 0.0
    %1256 = vmatpush.xpose.msra.mxu0 0.0
    %1257 = vmatpush.xpose.msra.mxu0 0.0
    %1258 = vmatpush.xpose.msra.mxu0 0.0
    %1259 = vmatpush.xpose.msra.mxu0 0.0
    %1260 = vmatpush.xpose.msra.mxu0 0.0
    %1261 = vmatpush.xpose.msra.mxu0 0.0
    %1262 = vmatpush.xpose.msra.mxu0 0.0
    %1263 = vmatpush.xpose.msra.mxu0 0.0
    %1264 = vmatpush.xpose.msra.mxu0 0.0
    %1265 = vmatpush.xpose.msra.mxu0 0.0
    %1266 = vmatpush.xpose.msra.mxu0 0.0
    %1267 = vmatpush.xpose.msra.mxu0 0.0
    %1268 = vmatpush.xpose.msra.mxu0 %v1251
    %1269 = vmatmul.f32.gmra.mxu0 %v1249
    %v1270 = vpop.f32.mrf.mxu0
    %v1271 = vadd.f32 0.0, %v1270
    %1272 = vdwg.mxu0
    %1273 = vrot.lane.b32.xlu0 %v1134, 96
    %v1274 = vpop.permute.xlu0 %1273
    %v1275 = vsel %vm183, %v1134, 0
    %v1277 = vsel %vm183, %v1274, 0
    %1279 = vmatpush.xpose.msra.mxu0 0.0
    %1280 = vmatpush.xpose.msra.mxu0 0.0
    %1281 = vmatpush.xpose.msra.mxu0 0.0
    %1282 = vmatpush.xpose.msra.mxu0 0.0
    %1283 = vmatpush.xpose.msra.mxu0 0.0
    %1284 = vmatpush.xpose.msra.mxu0 0.0
    %1285 = vmatpush.xpose.msra.mxu0 0.0
    %1286 = vmatpush.xpose.msra.mxu0 0.0
    %1287 = vmatpush.xpose.msra.mxu0 0.0
    %1288 = vmatpush.xpose.msra.mxu0 0.0
    %1289 = vmatpush.xpose.msra.mxu0 0.0
    %1290 = vmatpush.xpose.msra.mxu0 0.0
    %1291 = vmatpush.xpose.msra.mxu0 0.0
    %1292 = vmatpush.xpose.msra.mxu0 0.0
    %1293 = vmatpush.xpose.msra.mxu0 0.0
    %1294 = vmatpush.xpose.msra.mxu0 %v1277
    %1295 = vmatmul.f32.gmra.mxu0 %v1275
    %v1296 = vpop.f32.mrf.mxu0
    %v1297 = vadd.f32 0.0, %v1296
    %1298 = vdwg.mxu0
    %1299 = vrot.lane.b32.xlu0 %v1138, 96
    %v1300 = vpop.permute.xlu0 %1299
    %v1301 = vsel %vm183, %v1138, 0
    %v1303 = vsel %vm183, %v1300, 0
    %1305 = vmatpush.xpose.msra.mxu0 0.0
    %1306 = vmatpush.xpose.msra.mxu0 0.0
    %1307 = vmatpush.xpose.msra.mxu0 0.0
    %1308 = vmatpush.xpose.msra.mxu0 0.0
    %1309 = vmatpush.xpose.msra.mxu0 0.0
    %1310 = vmatpush.xpose.msra.mxu0 0.0
    %1311 = vmatpush.xpose.msra.mxu0 0.0
    %1312 = vmatpush.xpose.msra.mxu0 0.0
    %1313 = vmatpush.xpose.msra.mxu0 0.0
    %1314 = vmatpush.xpose.msra.mxu0 0.0
    %1315 = vmatpush.xpose.msra.mxu0 0.0
    %1316 = vmatpush.xpose.msra.mxu0 0.0
    %1317 = vmatpush.xpose.msra.mxu0 0.0
    %1318 = vmatpush.xpose.msra.mxu0 0.0
    %1319 = vmatpush.xpose.msra.mxu0 0.0
    %1320 = vmatpush.xpose.msra.mxu0 %v1303
    %1321 = vmatmul.f32.gmra.mxu0 %v1301
    %v1322 = vpop.f32.mrf.mxu0
    %v1323 = vadd.f32 0.0, %v1322
    %1324 = vdwg.mxu0
    %1325 = vrot.lane.b32.xlu0 %v1142, 96
    %v1326 = vpop.permute.xlu0 %1325
    %v1327 = vsel %vm183, %v1142, 0
    %v1329 = vsel %vm183, %v1326, 0
    %1331 = vmatpush.xpose.msra.mxu0 0.0
    %1332 = vmatpush.xpose.msra.mxu0 0.0
    %1333 = vmatpush.xpose.msra.mxu0 0.0
    %1334 = vmatpush.xpose.msra.mxu0 0.0
    %1335 = vmatpush.xpose.msra.mxu0 0.0
    %1336 = vmatpush.xpose.msra.mxu0 0.0
    %1337 = vmatpush.xpose.msra.mxu0 0.0
    %1338 = vmatpush.xpose.msra.mxu0 0.0
    %1339 = vmatpush.xpose.msra.mxu0 0.0
    %1340 = vmatpush.xpose.msra.mxu0 0.0
    %1341 = vmatpush.xpose.msra.mxu0 0.0
    %1342 = vmatpush.xpose.msra.mxu0 0.0
    %1343 = vmatpush.xpose.msra.mxu0 0.0
    %1344 = vmatpush.xpose.msra.mxu0 0.0
    %1345 = vmatpush.xpose.msra.mxu0 0.0
    %1346 = vmatpush.xpose.msra.mxu0 %v1329
    %1347 = vmatmul.f32.gmra.mxu0 %v1327
    %v1348 = vpop.f32.mrf.mxu0
    %v1349 = vadd.f32 0.0, %v1348
    %1350 = vdwg.mxu0
    %v1351 = vsel %vm183, %v1167, -inf
    %1352 = vmax.xlane.f32.xlu0 %v1351
    %v1353 = vpop.xlane.xlu0 %1352
    %v1354 = vsel %vm183, %v1193, -inf
    %1355 = vmax.xlane.f32.xlu0 %v1354
    %v1356 = vpop.xlane.xlu0 %1355
    %v1357 = vsel %vm183, %v1219, -inf
    %1358 = vmax.xlane.f32.xlu0 %v1357
    %v1359 = vpop.xlane.xlu0 %1358
    %v1360 = vsel %vm183, %v1245, -inf
    %1361 = vmax.xlane.f32.xlu0 %v1360
    %v1362 = vpop.xlane.xlu0 %1361
    %v1363 = vsel %vm183, %v1271, -inf
    %1364 = vmax.xlane.f32.xlu0 %v1363
    %v1365 = vpop.xlane.xlu0 %1364
    %v1366 = vsel %vm183, %v1297, -inf
    %1367 = vmax.xlane.f32.xlu0 %v1366
    %v1368 = vpop.xlane.xlu0 %1367
    %v1369 = vsel %vm183, %v1323, -inf
    %1370 = vmax.xlane.f32.xlu0 %v1369
    %v1371 = vpop.xlane.xlu0 %1370
    %v1372 = vsel %vm183, %v1349, -inf
    %1373 = vmax.xlane.f32.xlu0 %v1372
    %v1374 = vpop.xlane.xlu0 %1373
    %v1375 = vsub.f32 %v1167, %v1353
    %v1376 = vsub.f32 %v1193, %v1356
    %v1377 = vsub.f32 %v1219, %v1359
    %v1378 = vsub.f32 %v1245, %v1362
    %v1379 = vsub.f32 %v1271, %v1365
    %v1380 = vsub.f32 %v1297, %v1368
    %v1381 = vsub.f32 %v1323, %v1371
    %v1382 = vsub.f32 %v1349, %v1374
    %v1383 = vmul.f32 %v1375, 1.442695
    %v1384 = vpow.pop %v1383
    %v1385 = vmul.f32 %v1376, 1.442695
    %v1386 = vpow.pop %v1385
    %v1387 = vmul.f32 %v1377, 1.442695
    %v1388 = vpow.pop %v1387
    %v1389 = vmul.f32 %v1378, 1.442695
    %v1390 = vpow.pop %v1389
    %v1391 = vmul.f32 %v1379, 1.442695
    %v1392 = vpow.pop %v1391
    %v1393 = vmul.f32 %v1380, 1.442695
    %v1394 = vpow.pop %v1393
    %v1395 = vmul.f32 %v1381, 1.442695
    %v1396 = vpow.pop %v1395
    %v1397 = vmul.f32 %v1382, 1.442695
    %v1398 = vpow.pop %v1397
    %v1399 = vsel %vm183, %v1384, 0.0
    %1400 = vadd.xlane.f32.xlu0 %v1399
    %v1401 = vpop.xlane.xlu0 %1400
    %v1402 = vsel %vm183, %v1386, 0.0
    %1403 = vadd.xlane.f32.xlu0 %v1402
    %v1404 = vpop.xlane.xlu0 %1403
    %v1405 = vsel %vm183, %v1388, 0.0
    %1406 = vadd.xlane.f32.xlu0 %v1405
    %v1407 = vpop.xlane.xlu0 %1406
    %v1408 = vsel %vm183, %v1390, 0.0
    %1409 = vadd.xlane.f32.xlu0 %v1408
    %v1410 = vpop.xlane.xlu0 %1409
    %v1411 = vsel %vm183, %v1392, 0.0
    %1412 = vadd.xlane.f32.xlu0 %v1411
    %v1413 = vpop.xlane.xlu0 %1412
    %v1414 = vsel %vm183, %v1394, 0.0
    %1415 = vadd.xlane.f32.xlu0 %v1414
    %v1416 = vpop.xlane.xlu0 %1415
    %v1417 = vsel %vm183, %v1396, 0.0
    %1418 = vadd.xlane.f32.xlu0 %v1417
    %v1419 = vpop.xlane.xlu0 %1418
    %v1420 = vsel %vm183, %v1398, 0.0
    %1421 = vadd.xlane.f32.xlu0 %v1420
    %v1422 = vpop.xlane.xlu0 %1421
    %v1423 = vrcp.pop %v1401
    %v1424 = vrcp.pop %v1404
    %v1425 = vrcp.pop %v1407
    %v1426 = vrcp.pop %v1410
    %v1427 = vrcp.pop %v1413
    %v1428 = vrcp.pop %v1416
    %v1429 = vrcp.pop %v1419
    %v1430 = vrcp.pop %v1422
    %v1431 = vmul.f32 %v1384, %v1423
    %v1432 = vmul.f32 %v1386, %v1424
    %v1433 = vmul.f32 %v1388, %v1425
    %v1434 = vmul.f32 %v1390, %v1426
    %v1435 = vmul.f32 %v1392, %v1427
    %v1436 = vmul.f32 %v1394, %v1428
    %v1437 = vmul.f32 %v1396, %v1429
    %v1438 = vmul.f32 %v1398, %v1430
    %1439 = vrot.lane.b32.xlu0 %v1124, 64
    %v1440 = vpop.permute.xlu0 %1439
    %v1443 = vsel %vm183, %v1431, 0
    %1445 = vmatpush.msra.mxu0 0.0
    %1446 = vmatpush.msra.mxu0 0.0
    %1447 = vmatpush.msra.mxu0 0.0
    %1448 = vmatpush.msra.mxu0 0.0
    %1449 = vmatpush.msra.mxu0 0.0
    %1450 = vmatpush.msra.mxu0 0.0
    %1451 = vmatpush.msra.mxu0 0.0
    %1452 = vmatpush.msra.mxu0 0.0
    %1453 = vmatpush.msra.mxu0 0.0
    %1454 = vmatpush.msra.mxu0 0.0
    %1455 = vmatpush.msra.mxu0 0.0
    %1456 = vmatpush.msra.mxu0 0.0
    %1457 = vmatpush.msra.mxu0 0.0
    %1458 = vmatpush.msra.mxu0 0.0
    %1459 = vmatpush.msra.mxu0 0.0
    %1460 = vmatpush.msra.mxu0 %v1440
    %1461 = vmatmul.f32.gmra.mxu0 %v1443
    %v1462 = vpop.f32.mrf.mxu0
    %v1463 = vadd.f32 0.0, %v1462
    %1464 = vdwg.mxu0
    %1465 = vrot.lane.b32.xlu0 %v1132, 64
    %v1466 = vpop.permute.xlu0 %1465
    %v1469 = vsel %vm183, %v1432, 0
    %1471 = vmatpush.msra.mxu0 0.0
    %1472 = vmatpush.msra.mxu0 0.0
    %1473 = vmatpush.msra.mxu0 0.0
    %1474 = vmatpush.msra.mxu0 0.0
    %1475 = vmatpush.msra.mxu0 0.0
    %1476 = vmatpush.msra.mxu0 0.0
    %1477 = vmatpush.msra.mxu0 0.0
    %1478 = vmatpush.msra.mxu0 0.0
    %1479 = vmatpush.msra.mxu0 0.0
    %1480 = vmatpush.msra.mxu0 0.0
    %1481 = vmatpush.msra.mxu0 0.0
    %1482 = vmatpush.msra.mxu0 0.0
    %1483 = vmatpush.msra.mxu0 0.0
    %1484 = vmatpush.msra.mxu0 0.0
    %1485 = vmatpush.msra.mxu0 0.0
    %1486 = vmatpush.msra.mxu0 %v1466
    %1487 = vmatmul.f32.gmra.mxu0 %v1469
    %v1488 = vpop.f32.mrf.mxu0
    %v1489 = vadd.f32 0.0, %v1488
    %1490 = vdwg.mxu0
    %1491 = vrot.lane.b32.xlu0 %v1136, 64
    %v1492 = vpop.permute.xlu0 %1491
    %v1495 = vsel %vm183, %v1433, 0
    %1497 = vmatpush.msra.mxu0 0.0
    %1498 = vmatpush.msra.mxu0 0.0
    %1499 = vmatpush.msra.mxu0 0.0
    %1500 = vmatpush.msra.mxu0 0.0
    %1501 = vmatpush.msra.mxu0 0.0
    %1502 = vmatpush.msra.mxu0 0.0
    %1503 = vmatpush.msra.mxu0 0.0
    %1504 = vmatpush.msra.mxu0 0.0
    %1505 = vmatpush.msra.mxu0 0.0
    %1506 = vmatpush.msra.mxu0 0.0
    %1507 = vmatpush.msra.mxu0 0.0
    %1508 = vmatpush.msra.mxu0 0.0
    %1509 = vmatpush.msra.mxu0 0.0
    %1510 = vmatpush.msra.mxu0 0.0
    %1511 = vmatpush.msra.mxu0 0.0
    %1512 = vmatpush.msra.mxu0 %v1492
    %1513 = vmatmul.f32.gmra.mxu0 %v1495
    %v1514 = vpop.f32.mrf.mxu0
    %v1515 = vadd.f32 0.0, %v1514
    %1516 = vdwg.mxu0
    %1517 = vrot.lane.b32.xlu0 %v1140, 64
    %v1518 = vpop.permute.xlu0 %1517
    %v1521 = vsel %vm183, %v1434, 0
    %1523 = vmatpush.msra.mxu0 0.0
    %1524 = vmatpush.msra.mxu0 0.0
    %1525 = vmatpush.msra.mxu0 0.0
    %1526 = vmatpush.msra.mxu0 0.0
    %1527 = vmatpush.msra.mxu0 0.0
    %1528 = vmatpush.msra.mxu0 0.0
    %1529 = vmatpush.msra.mxu0 0.0
    %1530 = vmatpush.msra.mxu0 0.0
    %1531 = vmatpush.msra.mxu0 0.0
    %1532 = vmatpush.msra.mxu0 0.0
    %1533 = vmatpush.msra.mxu0 0.0
    %1534 = vmatpush.msra.mxu0 0.0
    %1535 = vmatpush.msra.mxu0 0.0
    %1536 = vmatpush.msra.mxu0 0.0
    %1537 = vmatpush.msra.mxu0 0.0
    %1538 = vmatpush.msra.mxu0 %v1518
    %1539 = vmatmul.f32.gmra.mxu0 %v1521
    %v1540 = vpop.f32.mrf.mxu0
    %v1541 = vadd.f32 0.0, %v1540
    %1542 = vdwg.mxu0
    %1543 = vrot.lane.b32.xlu0 %v1127, 64
    %v1544 = vpop.permute.xlu0 %1543
    %v1547 = vsel %vm183, %v1435, 0
    %1549 = vmatpush.msra.mxu0 0.0
    %1550 = vmatpush.msra.mxu0 0.0
    %1551 = vmatpush.msra.mxu0 0.0
    %1552 = vmatpush.msra.mxu0 0.0
    %1553 = vmatpush.msra.mxu0 0.0
    %1554 = vmatpush.msra.mxu0 0.0
    %1555 = vmatpush.msra.mxu0 0.0
    %1556 = vmatpush.msra.mxu0 0.0
    %1557 = vmatpush.msra.mxu0 0.0
    %1558 = vmatpush.msra.mxu0 0.0
    %1559 = vmatpush.msra.mxu0 0.0
    %1560 = vmatpush.msra.mxu0 0.0
    %1561 = vmatpush.msra.mxu0 0.0
    %1562 = vmatpush.msra.mxu0 0.0
    %1563 = vmatpush.msra.mxu0 0.0
    %1564 = vmatpush.msra.mxu0 %v1544
    %1565 = vmatmul.f32.gmra.mxu0 %v1547
    %v1566 = vpop.f32.mrf.mxu0
    %v1567 = vadd.f32 0.0, %v1566
    %1568 = vdwg.mxu0
    %1569 = vrot.lane.b32.xlu0 %v1134, 64
    %v1570 = vpop.permute.xlu0 %1569
    %v1573 = vsel %vm183, %v1436, 0
    %1575 = vmatpush.msra.mxu0 0.0
    %1576 = vmatpush.msra.mxu0 0.0
    %1577 = vmatpush.msra.mxu0 0.0
    %1578 = vmatpush.msra.mxu0 0.0
    %1579 = vmatpush.msra.mxu0 0.0
    %1580 = vmatpush.msra.mxu0 0.0
    %1581 = vmatpush.msra.mxu0 0.0
    %1582 = vmatpush.msra.mxu0 0.0
    %1583 = vmatpush.msra.mxu0 0.0
    %1584 = vmatpush.msra.mxu0 0.0
    %1585 = vmatpush.msra.mxu0 0.0
    %1586 = vmatpush.msra.mxu0 0.0
    %1587 = vmatpush.msra.mxu0 0.0
    %1588 = vmatpush.msra.mxu0 0.0
    %1589 = vmatpush.msra.mxu0 0.0
    %1590 = vmatpush.msra.mxu0 %v1570
    %1591 = vmatmul.f32.gmra.mxu0 %v1573
    %v1592 = vpop.f32.mrf.mxu0
    %v1593 = vadd.f32 0.0, %v1592
    %1594 = vdwg.mxu0
    %1595 = vrot.lane.b32.xlu0 %v1138, 64
    %v1596 = vpop.permute.xlu0 %1595
    %v1599 = vsel %vm183, %v1437, 0
    %1601 = vmatpush.msra.mxu0 0.0
    %1602 = vmatpush.msra.mxu0 0.0
    %1603 = vmatpush.msra.mxu0 0.0
    %1604 = vmatpush.msra.mxu0 0.0
    %1605 = vmatpush.msra.mxu0 0.0
    %1606 = vmatpush.msra.mxu0 0.0
    %1607 = vmatpush.msra.mxu0 0.0
    %1608 = vmatpush.msra.mxu0 0.0
    %1609 = vmatpush.msra.mxu0 0.0
    %1610 = vmatpush.msra.mxu0 0.0
    %1611 = vmatpush.msra.mxu0 0.0
    %1612 = vmatpush.msra.mxu0 0.0
    %1613 = vmatpush.msra.mxu0 0.0
    %1614 = vmatpush.msra.mxu0 0.0
    %1615 = vmatpush.msra.mxu0 0.0
    %1616 = vmatpush.msra.mxu0 %v1596
    %1617 = vmatmul.f32.gmra.mxu0 %v1599
    %v1618 = vpop.f32.mrf.mxu0
    %v1619 = vadd.f32 0.0, %v1618
    %1620 = vdwg.mxu0
    %1621 = vrot.lane.b32.xlu0 %v1142, 64
    %v1622 = vpop.permute.xlu0 %1621
    %v1625 = vsel %vm183, %v1438, 0
    %1627 = vmatpush.msra.mxu0 0.0
    %1628 = vmatpush.msra.mxu0 0.0
    %1629 = vmatpush.msra.mxu0 0.0
    %1630 = vmatpush.msra.mxu0 0.0
    %1631 = vmatpush.msra.mxu0 0.0
    %1632 = vmatpush.msra.mxu0 0.0
    %1633 = vmatpush.msra.mxu0 0.0
    %1634 = vmatpush.msra.mxu0 0.0
    %1635 = vmatpush.msra.mxu0 0.0
    %1636 = vmatpush.msra.mxu0 0.0
    %1637 = vmatpush.msra.mxu0 0.0
    %1638 = vmatpush.msra.mxu0 0.0
    %1639 = vmatpush.msra.mxu0 0.0
    %1640 = vmatpush.msra.mxu0 0.0
    %1641 = vmatpush.msra.mxu0 0.0
    %1642 = vmatpush.msra.mxu0 %v1622
    %1643 = vmatmul.f32.gmra.mxu0 %v1625
    %v1644 = vpop.f32.mrf.mxu0
    %v1645 = vadd.f32 0.0, %v1644
    %1646 = vdwg.mxu0
    %s1647 = scalar_lea.vmem %s4, 32
    %v1648 = vld [vmem:[%s1647] sm:$0xff]
    %v1649 = vld [vmem:[%s1647 + $0x8] sm:$0xff]
    %v1650 = vld [vmem:[%s1647 + $0x10] sm:$0xff]
    %v1651 = vld [vmem:[%s1647 + $0x18] sm:$0xff]
    %v1653 = vsel %vm183, %v1463, 0
    %1655 = vmatpush.msra.mxu0 0.0
    %1656 = vmatpush.msra.mxu0 0.0
    %1657 = vmatpush.msra.mxu0 0.0
    %1658 = vmatpush.msra.mxu0 0.0
    %1659 = vmatpush.msra.mxu0 0.0
    %1660 = vmatpush.msra.mxu0 0.0
    %1661 = vmatpush.msra.mxu0 0.0
    %1662 = vmatpush.msra.mxu0 0.0
    %1663 = vmatpush.msra.mxu0 0.0
    %1664 = vmatpush.msra.mxu0 0.0
    %1665 = vmatpush.msra.mxu0 0.0
    %1666 = vmatpush.msra.mxu0 0.0
    %1667 = vmatpush.msra.mxu0 0.0
    %1668 = vmatpush.msra.mxu0 0.0
    %1669 = vmatpush.msra.mxu0 0.0
    %1670 = vmatpush.msra.mxu0 %v1648
    %1671 = vmatmul.f32.gmra.mxu0 %v1653
    %v1672 = vpop.f32.mrf.mxu0
    %v1673 = vadd.f32 0.0, %v1672
    %1674 = vdwg.mxu0
    %v1676 = vsel %vm183, %v1489, 0
    %1678 = vmatpush.msra.mxu0 0.0
    %1679 = vmatpush.msra.mxu0 0.0
    %1680 = vmatpush.msra.mxu0 0.0
    %1681 = vmatpush.msra.mxu0 0.0
    %1682 = vmatpush.msra.mxu0 0.0
    %1683 = vmatpush.msra.mxu0 0.0
    %1684 = vmatpush.msra.mxu0 0.0
    %1685 = vmatpush.msra.mxu0 0.0
    %1686 = vmatpush.msra.mxu0 0.0
    %1687 = vmatpush.msra.mxu0 0.0
    %1688 = vmatpush.msra.mxu0 0.0
    %1689 = vmatpush.msra.mxu0 0.0
    %1690 = vmatpush.msra.mxu0 0.0
    %1691 = vmatpush.msra.mxu0 0.0
    %1692 = vmatpush.msra.mxu0 0.0
    %1693 = vmatpush.msra.mxu0 %v1649
    %1694 = vmatmul.f32.gmra.mxu0 %v1676
    %v1695 = vpop.f32.mrf.mxu0
    %v1696 = vadd.f32 0.0, %v1695
    %1697 = vdwg.mxu0
    %v1699 = vsel %vm183, %v1515, 0
    %1701 = vmatpush.msra.mxu0 0.0
    %1702 = vmatpush.msra.mxu0 0.0
    %1703 = vmatpush.msra.mxu0 0.0
    %1704 = vmatpush.msra.mxu0 0.0
    %1705 = vmatpush.msra.mxu0 0.0
    %1706 = vmatpush.msra.mxu0 0.0
    %1707 = vmatpush.msra.mxu0 0.0
    %1708 = vmatpush.msra.mxu0 0.0
    %1709 = vmatpush.msra.mxu0 0.0
    %1710 = vmatpush.msra.mxu0 0.0
    %1711 = vmatpush.msra.mxu0 0.0
    %1712 = vmatpush.msra.mxu0 0.0
    %1713 = vmatpush.msra.mxu0 0.0
    %1714 = vmatpush.msra.mxu0 0.0
    %1715 = vmatpush.msra.mxu0 0.0
    %1716 = vmatpush.msra.mxu0 %v1650
    %1717 = vmatmul.f32.gmra.mxu0 %v1699
    %v1718 = vpop.f32.mrf.mxu0
    %v1719 = vadd.f32 0.0, %v1718
    %1720 = vdwg.mxu0
    %v1722 = vsel %vm183, %v1541, 0
    %1724 = vmatpush.msra.mxu0 0.0
    %1725 = vmatpush.msra.mxu0 0.0
    %1726 = vmatpush.msra.mxu0 0.0
    %1727 = vmatpush.msra.mxu0 0.0
    %1728 = vmatpush.msra.mxu0 0.0
    %1729 = vmatpush.msra.mxu0 0.0
    %1730 = vmatpush.msra.mxu0 0.0
    %1731 = vmatpush.msra.mxu0 0.0
    %1732 = vmatpush.msra.mxu0 0.0
    %1733 = vmatpush.msra.mxu0 0.0
    %1734 = vmatpush.msra.mxu0 0.0
    %1735 = vmatpush.msra.mxu0 0.0
    %1736 = vmatpush.msra.mxu0 0.0
    %1737 = vmatpush.msra.mxu0 0.0
    %1738 = vmatpush.msra.mxu0 0.0
    %1739 = vmatpush.msra.mxu0 %v1651
    %1740 = vmatmul.f32.gmra.mxu0 %v1722
    %v1741 = vpop.f32.mrf.mxu0
    %v1742 = vadd.f32 0.0, %v1741
    %1743 = vdwg.mxu0
    %v1745 = vsel %vm183, %v1567, 0
    %1747 = vmatpush.msra.mxu0 0.0
    %1748 = vmatpush.msra.mxu0 0.0
    %1749 = vmatpush.msra.mxu0 0.0
    %1750 = vmatpush.msra.mxu0 0.0
    %1751 = vmatpush.msra.mxu0 0.0
    %1752 = vmatpush.msra.mxu0 0.0
    %1753 = vmatpush.msra.mxu0 0.0
    %1754 = vmatpush.msra.mxu0 0.0
    %1755 = vmatpush.msra.mxu0 0.0
    %1756 = vmatpush.msra.mxu0 0.0
    %1757 = vmatpush.msra.mxu0 0.0
    %1758 = vmatpush.msra.mxu0 0.0
    %1759 = vmatpush.msra.mxu0 0.0
    %1760 = vmatpush.msra.mxu0 0.0
    %1761 = vmatpush.msra.mxu0 0.0
    %1762 = vmatpush.msra.mxu0 %v1648
    %1763 = vmatmul.f32.gmra.mxu0 %v1745
    %v1764 = vpop.f32.mrf.mxu0
    %v1765 = vadd.f32 0.0, %v1764
    %1766 = vdwg.mxu0
    %v1768 = vsel %vm183, %v1593, 0
    %1770 = vmatpush.msra.mxu0 0.0
    %1771 = vmatpush.msra.mxu0 0.0
    %1772 = vmatpush.msra.mxu0 0.0
    %1773 = vmatpush.msra.mxu0 0.0
    %1774 = vmatpush.msra.mxu0 0.0
    %1775 = vmatpush.msra.mxu0 0.0
    %1776 = vmatpush.msra.mxu0 0.0
    %1777 = vmatpush.msra.mxu0 0.0
    %1778 = vmatpush.msra.mxu0 0.0
    %1779 = vmatpush.msra.mxu0 0.0
    %1780 = vmatpush.msra.mxu0 0.0
    %1781 = vmatpush.msra.mxu0 0.0
    %1782 = vmatpush.msra.mxu0 0.0
    %1783 = vmatpush.msra.mxu0 0.0
    %1784 = vmatpush.msra.mxu0 0.0
    %1785 = vmatpush.msra.mxu0 %v1649
    %1786 = vmatmul.f32.gmra.mxu0 %v1768
    %v1787 = vpop.f32.mrf.mxu0
    %v1788 = vadd.f32 0.0, %v1787
    %1789 = vdwg.mxu0
    %v1791 = vsel %vm183, %v1619, 0
    %1793 = vmatpush.msra.mxu0 0.0
    %1794 = vmatpush.msra.mxu0 0.0
    %1795 = vmatpush.msra.mxu0 0.0
    %1796 = vmatpush.msra.mxu0 0.0
    %1797 = vmatpush.msra.mxu0 0.0
    %1798 = vmatpush.msra.mxu0 0.0
    %1799 = vmatpush.msra.mxu0 0.0
    %1800 = vmatpush.msra.mxu0 0.0
    %1801 = vmatpush.msra.mxu0 0.0
    %1802 = vmatpush.msra.mxu0 0.0
    %1803 = vmatpush.msra.mxu0 0.0
    %1804 = vmatpush.msra.mxu0 0.0
    %1805 = vmatpush.msra.mxu0 0.0
    %1806 = vmatpush.msra.mxu0 0.0
    %1807 = vmatpush.msra.mxu0 0.0
    %1808 = vmatpush.msra.mxu0 %v1650
    %1809 = vmatmul.f32.gmra.mxu0 %v1791
    %v1810 = vpop.f32.mrf.mxu0
    %v1811 = vadd.f32 0.0, %v1810
    %1812 = vdwg.mxu0
    %v1814 = vsel %vm183, %v1645, 0
    %1816 = vmatpush.msra.mxu0 0.0
    %1817 = vmatpush.msra.mxu0 0.0
    %1818 = vmatpush.msra.mxu0 0.0
    %1819 = vmatpush.msra.mxu0 0.0
    %1820 = vmatpush.msra.mxu0 0.0
    %1821 = vmatpush.msra.mxu0 0.0
    %1822 = vmatpush.msra.mxu0 0.0
    %1823 = vmatpush.msra.mxu0 0.0
    %1824 = vmatpush.msra.mxu0 0.0
    %1825 = vmatpush.msra.mxu0 0.0
    %1826 = vmatpush.msra.mxu0 0.0
    %1827 = vmatpush.msra.mxu0 0.0
    %1828 = vmatpush.msra.mxu0 0.0
    %1829 = vmatpush.msra.mxu0 0.0
    %1830 = vmatpush.msra.mxu0 0.0
    %1831 = vmatpush.msra.mxu0 %v1651
    %1832 = vmatmul.f32.gmra.mxu0 %v1814
    %v1833 = vpop.f32.mrf.mxu0
    %v1834 = vadd.f32 0.0, %v1833
    %1835 = vdwg.mxu0
    %v1836 = vadd.f32 %v1673, %v1696
    %v1837 = vadd.f32 %v1765, %v1788
    %v1838 = vadd.f32 %v1836, %v1719
    %v1839 = vadd.f32 %v1837, %v1811
    %v1840 = vadd.f32 %v1838, %v1742
    %v1841 = vadd.f32 %v1839, %v1834
    %s1842 = scalar_lea.vmem [#allocation7], 1
    %v1843 = vld [vmem:[%s1842] sm:$0x1]
    %v1845 = vperm.slane %v1843, 0
    %v1847 = vadd.f32 %v1840, %v1845
    %v1848 = vadd.f32 %v1841, %v1845
    %v1849 = vadd.f32 %v1088, %v1847
    %v1850 = vadd.f32 %v1089, %v1848
    %s1851 = scalar_lea.vmem %s10, 1
    %v1852 = vld [vmem:[%s1851] sm:$0x1]
    %s1853 = scalar_lea.vmem [#allocation8], 1
    %v1854 = vld [vmem:[%s1853] sm:$0x1]
    %v1855 = vsel %vm137, %v1849, 0.0
    %1856 = vadd.xlane.f32.xlu0 %v1855
    %v1857 = vpop.xlane.xlu0 %1856
    %v1858 = vsel %vm137, %v1850, 0.0
    %1859 = vadd.xlane.f32.xlu0 %v1858
    %v1860 = vpop.xlane.xlu0 %1859
    %v1861 = vmul.f32 %v1857, %v902
    %v1862 = vmul.f32 %v1860, %v902
    %v1863 = vsub.f32 %v1849, %v1861
    %v1864 = vsub.f32 %v1850, %v1862
    %v1865 = vmul.f32 %v1863, %v1863
    %v1866 = vmul.f32 %v1864, %v1864
    %v1867 = vsel %vm137, %v1865, 0.0
    %1868 = vadd.xlane.f32.xlu0 %v1867
    %v1869 = vpop.xlane.xlu0 %1868
    %v1870 = vsel %vm137, %v1866, 0.0
    %1871 = vadd.xlane.f32.xlu0 %v1870
    %v1872 = vpop.xlane.xlu0 %1871
    %v1873 = vmul.f32 %v1869, %v902
    %v1874 = vmul.f32 %v1872, %v902
    %v1875 = vadd.f32 %v1873, 1e-05
    %v1876 = vadd.f32 %v1874, 1e-05
    %v1877 = vrsqrt.pop %v1875
    %v1878 = vmul.f32 %v1877, %v1875
    %v1879 = vmul.f32 %v1878, %v1877
    %v1880 = vmul.f32 0.5, %v1879
    %v1881 = vsub.f32 1.5, %v1880
    %v1882 = vmul.f32 %v1877, %v1881
    %vm1883 = vweird.f32 %v1875
    %vm1884 = vweird.f32 %v1877
    %vm1885 = vmor %vm1883, %vm1884
    %v1886 = vsel %vm1885, %v1877, %v1882
    %v1887 = vrsqrt.pop %v1876
    %v1888 = vmul.f32 %v1887, %v1876
    %v1889 = vmul.f32 %v1888, %v1887
    %v1890 = vmul.f32 0.5, %v1889
    %v1891 = vsub.f32 1.5, %v1890
    %v1892 = vmul.f32 %v1887, %v1891
    %vm1893 = vweird.f32 %v1876
    %vm1894 = vweird.f32 %v1887
    %vm1895 = vmor %vm1893, %vm1894
    %v1896 = vsel %vm1895, %v1887, %v1892
    %v1897 = vmul.f32 %v1863, %v1886
    %v1898 = vmul.f32 %v1864, %v1896
    %v1900 = vperm.slane %v1852, 0
    %v1902 = vmul.f32 %v1897, %v1900
    %v1903 = vmul.f32 %v1898, %v1900
    %v1905 = vperm.slane %v1854, 0
    %v1907 = vadd.f32 %v1902, %v1905
    %v1908 = vadd.f32 %v1903, %v1905
    %s1909 = scalar_lea.vmem %s6, 32
    %v1910 = vld [vmem:[%s1909] sm:$0xff]
    %v1911 = vld [vmem:[%s1909 + $0x8] sm:$0xff]
    %v1912 = vld [vmem:[%s1909 + $0x10] sm:$0xff]
    %v1913 = vld [vmem:[%s1909 + $0x18] sm:$0xff]
    %s1914 = scalar_lea.vmem %s7, 1
    %v1915 = vld [vmem:[%s1914] sm:$0x1]
    %v1917 = vperm.slane %v1915, 0
    %v1920 = vsel %vm137, %v1907, 0
    %v1923 = vsel %vm137, %v1908, 0
    %1925 = vmatpush.msra.mxu0 0.0
    %1926 = vmatpush.msra.mxu0 0.0
    %1927 = vmatpush.msra.mxu0 0.0
    %1928 = vmatpush.msra.mxu0 0.0
    %1929 = vmatpush.msra.mxu0 0.0
    %1930 = vmatpush.msra.mxu0 0.0
    %1931 = vmatpush.msra.mxu0 0.0
    %1932 = vmatpush.msra.mxu0 0.0
    %1933 = vmatpush.msra.mxu0 0.0
    %1934 = vmatpush.msra.mxu0 0.0
    %1935 = vmatpush.msra.mxu0 0.0
    %1936 = vmatpush.msra.mxu0 0.0
    %1937 = vmatpush.msra.mxu0 %v1913
    %1938 = vmatpush.msra.mxu0 %v1912
    %1939 = vmatpush.msra.mxu0 %v1911
    %1940 = vmatpush.msra.mxu0 %v1910
    %1941 = vmatmul.f32.gmra.mxu0 %v1920
    %v1942 = vpop.f32.mrf.mxu0
    %v1943 = vadd.f32 %v1917, %v1942
    %1944 = vmatmul.f32.gmra.mxu0 %v1923
    %v1945 = vpop.f32.mrf.mxu0
    %v1946 = vadd.f32 %v1917, %v1945
    %1947 = vdwg.mxu0
    %v1948 = vmax.f32 %v1943, 0.0
    %v1949 = vmax.f32 %v1946, 0.0
    %s1950 = scalar_lea.vmem %s8, 64
    %v1951 = vld [vmem:[%s1950] sm:$0xff]
    %v1952 = vld [vmem:[%s1950 + $0x8] sm:$0xff]
    %v1953 = vld [vmem:[%s1950 + $0x10] sm:$0xff]
    %v1954 = vld [vmem:[%s1950 + $0x18] sm:$0xff]
    %v1955 = vld [vmem:[%s1950 + $0x20] sm:$0xff]
    %v1956 = vld [vmem:[%s1950 + $0x28] sm:$0xff]
    %v1957 = vld [vmem:[%s1950 + $0x30] sm:$0xff]
    %v1958 = vld [vmem:[%s1950 + $0x38] sm:$0xff]
    %s1959 = scalar_lea.vmem %s9, 1
    %v1960 = vld [vmem:[%s1959] sm:$0x1]
    %v1962 = vperm.slane %v1960, 0
    %v1965 = vsel %vm1002, %v1948, 0
    %v1968 = vsel %vm1002, %v1949, 0
    %1970 = vmatpush.msra.mxu0 0.0
    %1971 = vmatpush.msra.mxu0 0.0
    %1972 = vmatpush.msra.mxu0 0.0
    %1973 = vmatpush.msra.mxu0 0.0
    %1974 = vmatpush.msra.mxu0 0.0
    %1975 = vmatpush.msra.mxu0 0.0
    %1976 = vmatpush.msra.mxu0 0.0
    %1977 = vmatpush.msra.mxu0 0.0
    %1978 = vmatpush.msra.mxu0 %v1958
    %1979 = vmatpush.msra.mxu0 %v1957
    %1980 = vmatpush.msra.mxu0 %v1956
    %1981 = vmatpush.msra.mxu0 %v1955
    %1982 = vmatpush.msra.mxu0 %v1954
    %1983 = vmatpush.msra.mxu0 %v1953
    %1984 = vmatpush.msra.mxu0 %v1952
    %1985 = vmatpush.msra.mxu0 %v1951
    %1986 = vmatmul.f32.gmra.mxu0 %v1965
    %v1987 = vpop.f32.mrf.mxu0
    %v1988 = vadd.f32 %v1962, %v1987
    %1989 = vmatmul.f32.gmra.mxu0 %v1968
    %v1990 = vpop.f32.mrf.mxu0
    %v1991 = vadd.f32 %v1962, %v1990
    %1992 = vdwg.mxu0
    %v1993 = vadd.f32 %v1907, %v1988
    %v1994 = vadd.f32 %v1908, %v1991
    %s1995 = scalar_lea.vmem %s12, 1
    %v1996 = vld [vmem:[%s1995] sm:$0x1]
    %s1997 = scalar_lea.vmem [#allocation10], 1
    %v1998 = vld [vmem:[%s1997] sm:$0x1]
    %v1999 = vsel %vm137, %v1993, 0.0
    %2000 = vadd.xlane.f32.xlu0 %v1999
    %v2001 = vpop.xlane.xlu0 %2000
    %v2002 = vsel %vm137, %v1994, 0.0
    %2003 = vadd.xlane.f32.xlu0 %v2002
    %v2004 = vpop.xlane.xlu0 %2003
    %v2005 = vmul.f32 %v2001, %v902
    %v2006 = vmul.f32 %v2004, %v902
    %v2007 = vsub.f32 %v1993, %v2005
    %v2008 = vsub.f32 %v1994, %v2006
    %v2009 = vmul.f32 %v2007, %v2007
    %v2010 = vmul.f32 %v2008, %v2008
    %v2011 = vsel %vm137, %v2009, 0.0
    %2012 = vadd.xlane.f32.xlu0 %v2011
    %v2013 = vpop.xlane.xlu0 %2012
    %v2014 = vsel %vm137, %v2010, 0.0
    %2015 = vadd.xlane.f32.xlu0 %v2014
    %v2016 = vpop.xlane.xlu0 %2015
    %v2017 = vmul.f32 %v2013, %v902
    %v2018 = vmul.f32 %v2016, %v902
    %v2019 = vadd.f32 %v2017, 1e-05
    %v2020 = vadd.f32 %v2018, 1e-05
    %v2021 = vrsqrt.pop %v2019
    %v2022 = vmul.f32 %v2021, %v2019
    %v2023 = vmul.f32 %v2022, %v2021
    %v2024 = vmul.f32 0.5, %v2023
    %v2025 = vsub.f32 1.5, %v2024
    %v2026 = vmul.f32 %v2021, %v2025
    %vm2027 = vweird.f32 %v2019
    %vm2028 = vweird.f32 %v2021
    %vm2029 = vmor %vm2027, %vm2028
    %v2030 = vsel %vm2029, %v2021, %v2026
    %v2031 = vrsqrt.pop %v2020
    %v2032 = vmul.f32 %v2031, %v2020
    %v2033 = vmul.f32 %v2032, %v2031
    %v2034 = vmul.f32 0.5, %v2033
    %v2035 = vsub.f32 1.5, %v2034
    %v2036 = vmul.f32 %v2031, %v2035
    %vm2037 = vweird.f32 %v2020
    %vm2038 = vweird.f32 %v2031
    %vm2039 = vmor %vm2037, %vm2038
    %v2040 = vsel %vm2039, %v2031, %v2036
    %v2041 = vmul.f32 %v2007, %v2030
    %v2042 = vmul.f32 %v2008, %v2040
    %v2044 = vperm.slane %v1996, 0
    %v2046 = vmul.f32 %v2041, %v2044
    %v2047 = vmul.f32 %v2042, %v2044
    %v2049 = vperm.slane %v1998, 0
    %v2051 = vadd.f32 %v2046, %v2049
    %v2052 = vadd.f32 %v2047, %v2049
    %2053 = vst.msk [vmem:[#allocation11] sm:$0xff] %vm137, %v2051
    %2054 = vst.msk [vmem:[#allocation11 + $0x8] sm:$0xff] %vm137, %v2052
    // Predicated region
    $region78: #{tpu_custom_call.1} parent=1 // pred_check
      _
    $region79: #{tpu_custom_call.1} parent=1 // pred_check_branch
      %2056 = sbr.rel (0) target = $region81
    $region80: #{tpu_custom_call.1} parent=1 // pred_region
      %2058 = vsyncadd [#allocation4], 0
      %s2059 = sshll.u32 [#allocation11], 4
      %s2060 = int_to_ptr.vmem [resolvable:$true] %s2059
      %s2061 = sshll.u32 %s14, 4
      %s2062 = int_to_ptr.hbm [resolvable:$true] %s2061
      %2067 = dma.vmem_to_hbm [thread:$0]  %s2060, 256, %s2062, [#allocation4], 128, 128, 8
    $region81: #{tpu_custom_call.1} parent=1 // pred_fallthru
      _
    // Predicated region
    $region82: #{tpu_custom_call.1} parent=1 // pred_check
      _
    $region83: #{tpu_custom_call.1} parent=1 // pred_check_branch
      %2069 = sbr.rel (0) target = $region85
    $region84: #{tpu_custom_call.1} parent=1 // pred_region
      %2071 = dma.done [#allocation4], 256
    $region85: #{tpu_custom_call.1} parent=1 // pred_fallthru
      _
    %2072 = vsyncpa [#allocation3], 1
    %2073 = vsyncpa [#allocation6], 1
    %2074 = vsyncpa [#allocation9], 1
    %2075 = vsyncpa [#allocation4], 1

</llo_original>
